<compile_context>
chip_gen: v5e
topology: v5e:2x2
jax: 0.10.0
libtpu: 0.0.40
codegen_flags: <defaults>
</compile_context>

<pallas_src>
import functools
import math

import jax
import jax.numpy as jnp
from jax.experimental import pallas as pl
from jax.experimental.pallas import tpu as pltpu


# ----------------------------- config (synthetic "args") -----------------------------
VOCAB_SIZE = 100
TYPE_VOCAB = 2
MAX_POS = 16
HIDDEN = 32          # args.hidden_sz
N_HEADS = 4
HEAD_DIM = HIDDEN // N_HEADS
INTERMEDIATE = 64
N_LAYERS = 2
LN_EPS = 1e-12

BATCH = 2
SEQ = 8


# ----------------------------- small helpers -----------------------------
def _layernorm(y, g, b):
    mu = jnp.mean(y, axis=-1, keepdims=True)
    var = jnp.mean((y - mu) * (y - mu), axis=-1, keepdims=True)
    return (y - mu) * jax.lax.rsqrt(var + LN_EPS) * g + b


def _gelu(y):
    # TODO(synk): original BERT uses exact erf-GELU; tanh approximation used here.
    return 0.5 * y * (1.0 + jnp.tanh(0.7978845608028654 * (y + 0.044715 * y * y * y)))


# ----------------------------- fused Pallas kernel -----------------------------
def _fused_bert_kernel(xemb_ref, qbatch_ref, kcode_ref, clssel_ref,
                       emb_g_ref, emb_b_ref,
                       wqkv_ref, bqkv_ref, wo_ref, bo_ref, g1_ref, b1_ref,
                       wi_ref, bi_ref, wo2_ref, bo2_ref, g2_ref, b2_ref,
                       pw_ref, pb_ref,
                       out_ref,
                       x_sc, bias_sc, ctx_sc,
                       *, n_heads, head_dim):
    """grid=(N_LAYERS,): one transformer layer per grid step, activation carried in VMEM."""
    layer = pl.program_id(0)
    H = n_heads * head_dim

    # ---- prologue (layer 0): embedding LayerNorm + build attention bias once ----
    @pl.when(layer == 0)
    def _prologue():
        x0 = xemb_ref[...].astype(jnp.float32)
        x_sc[...] = _layernorm(x0, emb_g_ref[...], emb_b_ref[...])
        # (M, 1) row batch-id  vs  (1, M) key code (batch-id, or -1 if padded key):
        # equal  -> same batch AND key not padded -> bias 0, else -10000.
        bias_sc[...] = jnp.where(qbatch_ref[...] == kcode_ref[...], 0.0, -10000.0)

    x = x_sc[...]                                    # (M, H) f32
    bias = bias_sc[...]                              # (M, M) additive mask

    # ---- fused QKV projection: one (M,H)@(H,3H) matmul (Q pre-scaled by 1/sqrt(dH)) ----
    qkv = jnp.dot(x, wqkv_ref[...], preferred_element_type=jnp.float32) + bqkv_ref[...]
    q, k, v = qkv[:, :H], qkv[:, H:2 * H], qkv[:, 2 * H:]

    # ---- attention: per-head static lane slice, context written to VMEM scratch ----
    for h in range(n_heads):
        sl = slice(h * head_dim, (h + 1) * head_dim)
        qh, kh, vh = q[:, sl], k[:, sl], v[:, sl]            # (M, dH) each
        s = jax.lax.dot_general(qh, kh, (((1,), (1,)), ((), ())),
                                preferred_element_type=jnp.float32)
        s = s + bias                                         # scale already folded into wqkv
        m = jnp.max(s, axis=-1, keepdims=True)
        p = jnp.exp(s - m)
        denom = jnp.sum(p, axis=-1, keepdims=True)
        p = p * pl.reciprocal(denom, approx=True)            # EUP slot, frees VALU
        ctx_sc[:, sl] = jnp.dot(p, vh, preferred_element_type=jnp.float32)

    ctx = ctx_sc[...]                                        # (M, H)

    # ---- attention output projection + fused residual + LayerNorm ----
    attn_out = jnp.dot(ctx, wo_ref[...], preferred_element_type=jnp.float32) + bo_ref[...]
    h1 = _layernorm(attn_out + x, g1_ref[...], b1_ref[...])

    # ---- FFN (GELU) + fused residual + LayerNorm ----
    ff = jnp.dot(h1, wi_ref[...], preferred_element_type=jnp.float32) + bi_ref[...]
    ff = _gelu(ff)
    ff = jnp.dot(ff, wo2_ref[...], preferred_element_type=jnp.float32) + bo2_ref[...]
    x_new = _layernorm(ff + h1, g2_ref[...], b2_ref[...])
    x_sc[...] = x_new                                        # carry to next layer

    # ---- epilogue (last layer): pooler tanh(Linear(CLS)) -> the only HBM store ----
    @pl.when(layer == pl.num_programs(0) - 1)
    def _epilogue():
        # CLS rows extracted with a tiny one-hot (B, M) selection matmul (MXU-friendly,
        # avoids strided/reshape vreg shuffles inside the kernel).
        cls = jnp.dot(clssel_ref[...], x_new, preferred_element_type=jnp.float32)  # (B, H)
        pooled = jnp.tanh(jnp.dot(cls, pw_ref[...],
                                  preferred_element_type=jnp.float32) + pb_ref[...])
        out_ref[...] = pooled.astype(out_ref.dtype)


# ----------------------------- Pallas wrapper -----------------------------
def pallas_bert_encoder(x_emb, q_batch, k_code, cls_sel, params):
    M, H = x_emb.shape
    B = cls_sel.shape[0]
    L = params["wqkv"].shape[0]

    def rep(shape):
        # whole array as a single block, same block every grid step (stays resident)
        return pl.BlockSpec(shape, lambda l, _n=len(shape): (0,) * _n)

    def per_layer(shape):
        # stacked per-layer array: leading layer dim squeezed, block l selected per step
        return pl.BlockSpec((None,) + tuple(shape[1:]),
                            lambda l, _n=len(shape): (l,) + (0,) * (_n - 1))

    inputs = [
        x_emb, q_batch, k_code, cls_sel,
        params["emb_ln_g"], params["emb_ln_b"],
        params["wqkv"], params["bqkv"], params["wo"], params["bo"],
        params["ln1_g"], params["ln1_b"],
        params["wi"], params["bi"], params["wo2"], params["bo2"],
        params["ln2_g"], params["ln2_b"],
        params["pool_w"], params["pool_b"],
    ]
    in_specs = [
        rep(x_emb.shape), rep(q_batch.shape), rep(k_code.shape), rep(cls_sel.shape),
        rep(params["emb_ln_g"].shape), rep(params["emb_ln_b"].shape),
        per_layer(params["wqkv"].shape), per_layer(params["bqkv"].shape),
        per_layer(params["wo"].shape), per_layer(params["bo"].shape),
        per_layer(params["ln1_g"].shape), per_layer(params["ln1_b"].shape),
        per_layer(params["wi"].shape), per_layer(params["bi"].shape),
        per_layer(params["wo2"].shape), per_layer(params["bo2"].shape),
        per_layer(params["ln2_g"].shape), per_layer(params["ln2_b"].shape),
        rep(params["pool_w"].shape), rep(params["pool_b"].shape),
    ]

    return pl.pallas_call(
        functools.partial(_fused_bert_kernel, n_heads=N_HEADS, head_dim=HEAD_DIM),
        out_shape=jax.ShapeDtypeStruct((B, H), x_emb.dtype),
        grid=(L,),
        in_specs=in_specs,
        out_specs=rep((B, H)),
        scratch_shapes=[
            pltpu.VMEM((M, H), jnp.float32),   # carried activation
            pltpu.VMEM((M, M), jnp.float32),   # additive attention bias (built at l==0)
            pltpu.VMEM((M, H), jnp.float32),   # per-head context assembly
        ],
        compiler_params=pltpu.CompilerParams(dimension_semantics=("arbitrary",)),
    )(*inputs)


# ----------------------------- parameter init -----------------------------
def init_params(key):
    def normal(k, shape):
        return jax.random.normal(k, shape, jnp.float32) * 0.02

    keys = iter(jax.random.split(key, 4 + N_LAYERS * 6))
    H, I, L = HIDDEN, INTERMEDIATE, N_LAYERS
    scale = 1.0 / math.sqrt(HEAD_DIM)

    wqkv, wo, wi, wo2 = [], [], [], []
    for _ in range(L):
        wq = normal(next(keys), (H, H)) * scale     # fold 1/sqrt(head_dim) into Q columns
        wk = normal(next(keys), (H, H))
        wv = normal(next(keys), (H, H))
        wqkv.append(jnp.concatenate([wq, wk, wv], axis=1))   # (H, 3H)
        wo.append(normal(next(keys), (H, H)))
        wi.append(normal(next(keys), (H, I)))
        wo2.append(normal(next(keys), (I, H)))

    return {
        "word_emb": normal(next(keys), (VOCAB_SIZE, H)),
        "pos_emb": normal(next(keys), (MAX_POS, H)),
        "type_emb": normal(next(keys), (TYPE_VOCAB, H)),
        "emb_ln_g": jnp.ones((1, H), jnp.float32),
        "emb_ln_b": jnp.zeros((1, H), jnp.float32),
        "pool_w": normal(next(keys), (H, H)),
        "pool_b": jnp.zeros((1, H), jnp.float32),
        # per-layer params stacked with a leading layer dim (Q bias also pre-scaled; zero here)
        "wqkv": jnp.stack(wqkv),                       # (L, H, 3H)
        "bqkv": jnp.zeros((L, 1, 3 * H), jnp.float32),
        "wo": jnp.stack(wo), "bo": jnp.zeros((L, 1, H), jnp.float32),
        "ln1_g": jnp.ones((L, 1, H), jnp.float32), "ln1_b": jnp.zeros((L, 1, H), jnp.float32),
        "wi": jnp.stack(wi), "bi": jnp.zeros((L, 1, I), jnp.float32),
        "wo2": jnp.stack(wo2), "bo2": jnp.zeros((L, 1, H), jnp.float32),
        "ln2_g": jnp.ones((L, 1, H), jnp.float32), "ln2_b": jnp.zeros((L, 1, H), jnp.float32),
    }


# ----------------------------- forward pass -----------------------------
def bert_encoder_forward(params, txt, mask, segment):
    """BertEncoder.forward: returns the pooled output tanh(W_p @ CLS + b_p), shape (B, H)."""
    B, S = txt.shape
    H = HIDDEN
    M = B * S

    # --- embeddings (gathers are plain-JAX glue; LayerNorm is fused into the kernel prologue) ---
    pos_ids = jnp.arange(S)
    x_emb = (params["word_emb"][txt]
             + params["pos_emb"][pos_ids][None, :, :]
             + params["type_emb"][segment]).reshape(M, H).astype(jnp.float32)

    # --- O(M) mask/batch metadata (the (M,M) bias is rebuilt once inside the kernel) ---
    batch_id = jnp.repeat(jnp.arange(B, dtype=jnp.int32), S)              # (M,)
    q_batch = batch_id.reshape(M, 1)                                      # (M, 1)
    k_code = jnp.where(mask.reshape(M) != 0, batch_id,
                       jnp.int32(-1)).reshape(1, M)                       # (1, M)

    # one-hot CLS-row selector (row b picks flattened token b*S)
    cls_sel = (jnp.arange(M, dtype=jnp.int32)[None, :] ==
               (jnp.arange(B, dtype=jnp.int32) * S)[:, None]).astype(jnp.float32)  # (B, M)

    # --- everything else in ONE fused pallas_call ---
    return pallas_bert_encoder(x_emb, q_batch, k_code, cls_sel, params)   # (B, H)


# ----------------------------- main -----------------------------
if __name__ == "__main__":
    key = jax.random.PRNGKey(0)
    k_param, k_txt, k_seg = jax.random.split(key, 3)

    params = init_params(k_param)

    txt = jax.random.randint(k_txt, (BATCH, SEQ), 0, VOCAB_SIZE, dtype=jnp.int32)
    segment = jax.random.randint(k_seg, (BATCH, SEQ), 0, TYPE_VOCAB, dtype=jnp.int32)
    # attention mask: second example has last 3 positions padded out
    mask = jnp.ones((BATCH, SEQ), dtype=jnp.int32)
    mask = mask.at[1, SEQ - 3:].set(0)

    pooled = bert_encoder_forward(params, txt, mask, segment)
    jax.block_until_ready(pooled)

    assert pooled.shape == (BATCH, HIDDEN)
    assert bool(jnp.all(jnp.isfinite(pooled)))
    print("KERNEL_OK")
</pallas_src>

<mosaic_0001>
module attributes {stable_mosaic.version = 11 : i64} {
  func.func @_fused_bert_kernel(%arg0: i32, %arg1: memref<16x32xf32, #tpu.memory_space<vmem>>, %arg2: memref<16x1xi32, #tpu.memory_space<vmem>>, %arg3: memref<1x16xi32, #tpu.memory_space<vmem>>, %arg4: memref<2x16xf32, #tpu.memory_space<vmem>>, %arg5: memref<1x32xf32, #tpu.memory_space<vmem>>, %arg6: memref<1x32xf32, #tpu.memory_space<vmem>>, %arg7: memref<1x32x96xf32, #tpu.memory_space<vmem>>, %arg8: memref<1x1x96xf32, #tpu.memory_space<vmem>>, %arg9: memref<1x32x32xf32, #tpu.memory_space<vmem>>, %arg10: memref<1x1x32xf32, #tpu.memory_space<vmem>>, %arg11: memref<1x1x32xf32, #tpu.memory_space<vmem>>, %arg12: memref<1x1x32xf32, #tpu.memory_space<vmem>>, %arg13: memref<1x32x64xf32, #tpu.memory_space<vmem>>, %arg14: memref<1x1x64xf32, #tpu.memory_space<vmem>>, %arg15: memref<1x64x32xf32, #tpu.memory_space<vmem>>, %arg16: memref<1x1x32xf32, #tpu.memory_space<vmem>>, %arg17: memref<1x1x32xf32, #tpu.memory_space<vmem>>, %arg18: memref<1x1x32xf32, #tpu.memory_space<vmem>>, %arg19: memref<32x32xf32, #tpu.memory_space<vmem>>, %arg20: memref<1x32xf32, #tpu.memory_space<vmem>>, %arg21: memref<2x32xf32, #tpu.memory_space<vmem>>, %arg22: memref<16x32xf32, #tpu.memory_space<vmem>>, %arg23: memref<16x16xf32, #tpu.memory_space<vmem>>, %arg24: memref<16x32xf32, #tpu.memory_space<vmem>>) attributes {dimension_semantics = [#tpu.dimension_semantics<arbitrary>], iteration_bounds = array<i64: 2>, scalar_prefetch = 0 : i64, scratch_operands = 3 : i64, tpu.core_type = #tpu.core_type<tc>, window_params = [{pipeline_mode = #tpu.pipeline_mode<synchronous>, transform_indices = @transform_0, window_bounds = array<i64: 16, 32>}, {pipeline_mode = #tpu.pipeline_mode<synchronous>, transform_indices = @transform_1, window_bounds = array<i64: 16, 1>}, {pipeline_mode = #tpu.pipeline_mode<synchronous>, transform_indices = @transform_2, window_bounds = array<i64: 1, 16>}, {pipeline_mode = #tpu.pipeline_mode<synchronous>, transform_indices = @transform_3, window_bounds = array<i64: 2, 16>}, {pipeline_mode = #tpu.pipeline_mode<synchronous>, transform_indices = @transform_4, window_bounds = array<i64: 1, 32>}, {pipeline_mode = #tpu.pipeline_mode<synchronous>, transform_indices = @transform_5, window_bounds = array<i64: 1, 32>}, {transform_indices = @transform_6, window_bounds = array<i64: 1, 32, 96>}, {transform_indices = @transform_7, window_bounds = array<i64: 1, 1, 96>}, {transform_indices = @transform_8, window_bounds = array<i64: 1, 32, 32>}, {transform_indices = @transform_9, window_bounds = array<i64: 1, 1, 32>}, {transform_indices = @transform_10, window_bounds = array<i64: 1, 1, 32>}, {transform_indices = @transform_11, window_bounds = array<i64: 1, 1, 32>}, {transform_indices = @transform_12, window_bounds = array<i64: 1, 32, 64>}, {transform_indices = @transform_13, window_bounds = array<i64: 1, 1, 64>}, {transform_indices = @transform_14, window_bounds = array<i64: 1, 64, 32>}, {transform_indices = @transform_15, window_bounds = array<i64: 1, 1, 32>}, {transform_indices = @transform_16, window_bounds = array<i64: 1, 1, 32>}, {transform_indices = @transform_17, window_bounds = array<i64: 1, 1, 32>}, {pipeline_mode = #tpu.pipeline_mode<synchronous>, transform_indices = @transform_18, window_bounds = array<i64: 32, 32>}, {pipeline_mode = #tpu.pipeline_mode<synchronous>, transform_indices = @transform_19, window_bounds = array<i64: 1, 32>}, {pipeline_mode = #tpu.pipeline_mode<synchronous>, transform_indices = @transform_20, window_bounds = array<i64: 2, 32>}]} {
    %c0_i32 = arith.constant 0 : i32
    %0 = arith.cmpi eq, %arg0, %c0_i32 : i32
    %1 = arith.extui %0 : i1 to i32
    %c0_i32_0 = arith.constant 0 : i32
    %2 = arith.cmpi ne, %1, %c0_i32_0 : i32
    scf.if %2 {
      %c0_83 = arith.constant 0 : index
      %c0_84 = arith.constant 0 : index
      %180 = vector.load %arg1[%c0_83, %c0_84] : memref<16x32xf32, #tpu.memory_space<vmem>>, vector<16x32xf32>
      %c0_85 = arith.constant 0 : index
      %c0_86 = arith.constant 0 : index
      %181 = vector.load %arg5[%c0_85, %c0_86] : memref<1x32xf32, #tpu.memory_space<vmem>>, vector<1x32xf32>
      %c0_87 = arith.constant 0 : index
      %c0_88 = arith.constant 0 : index
      %182 = vector.load %arg6[%c0_87, %c0_88] : memref<1x32xf32, #tpu.memory_space<vmem>>, vector<1x32xf32>
      %cst_89 = arith.constant dense<0.000000e+00> : vector<16xf32>
      %183 = vector.multi_reduction <add>, %180, %cst_89 [1] : vector<16x32xf32> to vector<16xf32>
      %184 = vector.shape_cast %183 : vector<16xf32> to vector<16x1xf32>
      %cst_90 = arith.constant 3.200000e+01 : f32
      %185 = vector.broadcast %cst_90 : f32 to vector<16x1xf32>
      %186 = arith.divf %184, %185 : vector<16x1xf32>
      %187 = vector.broadcast %186 : vector<16x1xf32> to vector<16x32xf32>
      %188 = arith.subf %180, %187 : vector<16x32xf32>
      %189 = vector.broadcast %186 : vector<16x1xf32> to vector<16x32xf32>
      %190 = arith.subf %180, %189 : vector<16x32xf32>
      %191 = arith.mulf %188, %190 : vector<16x32xf32>
      %cst_91 = arith.constant dense<0.000000e+00> : vector<16xf32>
      %192 = vector.multi_reduction <add>, %191, %cst_91 [1] : vector<16x32xf32> to vector<16xf32>
      %193 = vector.shape_cast %192 : vector<16xf32> to vector<16x1xf32>
      %cst_92 = arith.constant 3.200000e+01 : f32
      %194 = vector.broadcast %cst_92 : f32 to vector<16x1xf32>
      %195 = arith.divf %193, %194 : vector<16x1xf32>
      %196 = vector.broadcast %186 : vector<16x1xf32> to vector<16x32xf32>
      %197 = arith.subf %180, %196 : vector<16x32xf32>
      %cst_93 = arith.constant 9.99999996E-13 : f32
      %198 = vector.broadcast %cst_93 : f32 to vector<16x1xf32>
      %199 = arith.addf %195, %198 : vector<16x1xf32>
      %200 = math.rsqrt %199 : vector<16x1xf32>
      %201 = vector.broadcast %200 : vector<16x1xf32> to vector<16x32xf32>
      %202 = arith.mulf %197, %201 : vector<16x32xf32>
      %203 = vector.broadcast %181 : vector<1x32xf32> to vector<16x32xf32>
      %204 = arith.mulf %202, %203 : vector<16x32xf32>
      %205 = vector.broadcast %182 : vector<1x32xf32> to vector<16x32xf32>
      %206 = arith.addf %204, %205 : vector<16x32xf32>
      %c0_94 = arith.constant 0 : index
      %c0_95 = arith.constant 0 : index
      %207 = vector.load %arg22[%c0_94, %c0_95] : memref<16x32xf32, #tpu.memory_space<vmem>>, vector<16x32xf32>
      tpu.vector_store %arg22[%c0_94, %c0_95], %206 {strides = array<i32>} : memref<16x32xf32, #tpu.memory_space<vmem>>, vector<16x32xf32>,
      %c0_96 = arith.constant 0 : index
      %c0_97 = arith.constant 0 : index
      %208 = vector.load %arg2[%c0_96, %c0_97] : memref<16x1xi32, #tpu.memory_space<vmem>>, vector<16x1xi32>
      %c0_98 = arith.constant 0 : index
      %c0_99 = arith.constant 0 : index
      %209 = vector.load %arg3[%c0_98, %c0_99] : memref<1x16xi32, #tpu.memory_space<vmem>>, vector<1x16xi32>
      %210 = vector.broadcast %208 : vector<16x1xi32> to vector<16x16xi32>
      %211 = vector.broadcast %209 : vector<1x16xi32> to vector<16x16xi32>
      %212 = arith.cmpi eq, %210, %211 : vector<16x16xi32>
      %cst_100 = arith.constant 0.000000e+00 : f32
      %cst_101 = arith.constant -1.000000e+04 : f32
      %213 = vector.broadcast %cst_100 : f32 to vector<16x16xf32>
      %214 = vector.broadcast %cst_101 : f32 to vector<16x16xf32>
      %215 = arith.select %212, %213, %214 : vector<16x16xi1>, vector<16x16xf32>
      %c0_102 = arith.constant 0 : index
      %c0_103 = arith.constant 0 : index
      %216 = vector.load %arg23[%c0_102, %c0_103] : memref<16x16xf32, #tpu.memory_space<vmem>>, vector<16x16xf32>
      tpu.vector_store %arg23[%c0_102, %c0_103], %215 {strides = array<i32>} : memref<16x16xf32, #tpu.memory_space<vmem>>, vector<16x16xf32>,
    } else {
    }
    %c0 = arith.constant 0 : index
    %c0_1 = arith.constant 0 : index
    %3 = vector.load %arg22[%c0, %c0_1] : memref<16x32xf32, #tpu.memory_space<vmem>>, vector<16x32xf32>
    %c0_2 = arith.constant 0 : index
    %c0_3 = arith.constant 0 : index
    %4 = vector.load %arg23[%c0_2, %c0_3] : memref<16x16xf32, #tpu.memory_space<vmem>>, vector<16x16xf32>
    %c0_4 = arith.constant 0 : index
    %c0_5 = arith.constant 0 : index
    %c0_6 = arith.constant 0 : index
    %5 = vector.load %arg7[%c0_4, %c0_5, %c0_6] : memref<1x32x96xf32, #tpu.memory_space<vmem>>, vector<1x32x96xf32>
    %6 = vector.shape_cast %5 : vector<1x32x96xf32> to vector<32x96xf32>
    %cst = arith.constant dense<0.000000e+00> : vector<16x96xf32>
    %7 = tpu.matmul %3, %6, %cst {dimension_numbers = #tpu.dot_dimension_numbers<[1], [0], [0], [1], [0, 0, 1, 1], [], []>} : vector<16x32xf32>, vector<32x96xf32>, vector<16x96xf32> -> vector<16x96xf32>
    %c0_7 = arith.constant 0 : index
    %c0_8 = arith.constant 0 : index
    %c0_9 = arith.constant 0 : index
    %8 = vector.load %arg8[%c0_7, %c0_8, %c0_9] : memref<1x1x96xf32, #tpu.memory_space<vmem>>, vector<1x1x96xf32>
    %9 = vector.shape_cast %8 : vector<1x1x96xf32> to vector<1x96xf32>
    %10 = vector.broadcast %9 : vector<1x96xf32> to vector<16x96xf32>
    %11 = arith.addf %7, %10 : vector<16x96xf32>
    %12 = vector.extract_strided_slice %11 {offsets = [0, 0], sizes = [16, 32], strides = [1, 1]} : vector<16x96xf32> to vector<16x32xf32>
    %13 = vector.extract_strided_slice %11 {offsets = [0, 32], sizes = [16, 32], strides = [1, 1]} : vector<16x96xf32> to vector<16x32xf32>
    %14 = vector.extract_strided_slice %11 {offsets = [0, 64], sizes = [16, 32], strides = [1, 1]} : vector<16x96xf32> to vector<16x32xf32>
    %15 = vector.extract_strided_slice %12 {offsets = [0, 0], sizes = [16, 8], strides = [1, 1]} : vector<16x32xf32> to vector<16x8xf32>
    %16 = vector.extract_strided_slice %13 {offsets = [0, 0], sizes = [16, 8], strides = [1, 1]} : vector<16x32xf32> to vector<16x8xf32>
    %17 = vector.extract_strided_slice %14 {offsets = [0, 0], sizes = [16, 8], strides = [1, 1]} : vector<16x32xf32> to vector<16x8xf32>
    %cst_10 = arith.constant dense<0.000000e+00> : vector<16x16xf32>
    %18 = tpu.matmul %15, %16, %cst_10 {dimension_numbers = #tpu.dot_dimension_numbers<[1], [1], [0], [0], [0, 0, 1, 0], [], []>} : vector<16x8xf32>, vector<16x8xf32>, vector<16x16xf32> -> vector<16x16xf32>
    %19 = arith.addf %18, %4 : vector<16x16xf32>
    %cst_11 = arith.constant dense<0xFF800000> : vector<16xf32>
    %20 = vector.multi_reduction <maximumf>, %19, %cst_11 [1] : vector<16x16xf32> to vector<16xf32>
    %21 = vector.shape_cast %20 : vector<16xf32> to vector<16x1xf32>
    %22 = vector.broadcast %21 : vector<16x1xf32> to vector<16x16xf32>
    %23 = arith.subf %19, %22 : vector<16x16xf32>
    %24 = math.exp %23 : vector<16x16xf32>
    %cst_12 = arith.constant dense<0.000000e+00> : vector<16xf32>
    %25 = vector.multi_reduction <add>, %24, %cst_12 [1] : vector<16x16xf32> to vector<16xf32>
    %26 = vector.shape_cast %25 : vector<16xf32> to vector<16x1xf32>
    %27 = tpu.reciprocal %26 {approx = true} : vector<16x1xf32> -> vector<16x1xf32>
    %28 = vector.broadcast %27 : vector<16x1xf32> to vector<16x16xf32>
    %29 = arith.mulf %24, %28 : vector<16x16xf32>
    %cst_13 = arith.constant dense<0.000000e+00> : vector<16x8xf32>
    %30 = tpu.matmul %29, %17, %cst_13 {dimension_numbers = #tpu.dot_dimension_numbers<[1], [0], [0], [1], [0, 0, 1, 1], [], []>} : vector<16x16xf32>, vector<16x8xf32>, vector<16x8xf32> -> vector<16x8xf32>
    %c0_14 = arith.constant 0 : index
    %c0_15 = arith.constant 0 : index
    %31 = vector.load %arg24[%c0_14, %c0_15] : memref<16x32xf32, #tpu.memory_space<vmem>>, vector<16x8xf32>
    tpu.vector_store %arg24[%c0_14, %c0_15], %30 {strides = array<i32>} : memref<16x32xf32, #tpu.memory_space<vmem>>, vector<16x8xf32>,
    %32 = vector.extract_strided_slice %12 {offsets = [0, 8], sizes = [16, 8], strides = [1, 1]} : vector<16x32xf32> to vector<16x8xf32>
    %33 = vector.extract_strided_slice %13 {offsets = [0, 8], sizes = [16, 8], strides = [1, 1]} : vector<16x32xf32> to vector<16x8xf32>
    %34 = vector.extract_strided_slice %14 {offsets = [0, 8], sizes = [16, 8], strides = [1, 1]} : vector<16x32xf32> to vector<16x8xf32>
    %cst_16 = arith.constant dense<0.000000e+00> : vector<16x16xf32>
    %35 = tpu.matmul %32, %33, %cst_16 {dimension_numbers = #tpu.dot_dimension_numbers<[1], [1], [0], [0], [0, 0, 1, 0], [], []>} : vector<16x8xf32>, vector<16x8xf32>, vector<16x16xf32> -> vector<16x16xf32>
    %36 = arith.addf %35, %4 : vector<16x16xf32>
    %cst_17 = arith.constant dense<0xFF800000> : vector<16xf32>
    %37 = vector.multi_reduction <maximumf>, %36, %cst_17 [1] : vector<16x16xf32> to vector<16xf32>
    %38 = vector.shape_cast %37 : vector<16xf32> to vector<16x1xf32>
    %39 = vector.broadcast %38 : vector<16x1xf32> to vector<16x16xf32>
    %40 = arith.subf %36, %39 : vector<16x16xf32>
    %41 = math.exp %40 : vector<16x16xf32>
    %cst_18 = arith.constant dense<0.000000e+00> : vector<16xf32>
    %42 = vector.multi_reduction <add>, %41, %cst_18 [1] : vector<16x16xf32> to vector<16xf32>
    %43 = vector.shape_cast %42 : vector<16xf32> to vector<16x1xf32>
    %44 = tpu.reciprocal %43 {approx = true} : vector<16x1xf32> -> vector<16x1xf32>
    %45 = vector.broadcast %44 : vector<16x1xf32> to vector<16x16xf32>
    %46 = arith.mulf %41, %45 : vector<16x16xf32>
    %cst_19 = arith.constant dense<0.000000e+00> : vector<16x8xf32>
    %47 = tpu.matmul %46, %34, %cst_19 {dimension_numbers = #tpu.dot_dimension_numbers<[1], [0], [0], [1], [0, 0, 1, 1], [], []>} : vector<16x16xf32>, vector<16x8xf32>, vector<16x8xf32> -> vector<16x8xf32>
    %c0_20 = arith.constant 0 : index
    %c8 = arith.constant 8 : index
    %48 = vector.load %arg24[%c0_20, %c8] : memref<16x32xf32, #tpu.memory_space<vmem>>, vector<16x8xf32>
    tpu.vector_store %arg24[%c0_20, %c8], %47 {strides = array<i32>} : memref<16x32xf32, #tpu.memory_space<vmem>>, vector<16x8xf32>,
    %49 = vector.extract_strided_slice %12 {offsets = [0, 16], sizes = [16, 8], strides = [1, 1]} : vector<16x32xf32> to vector<16x8xf32>
    %50 = vector.extract_strided_slice %13 {offsets = [0, 16], sizes = [16, 8], strides = [1, 1]} : vector<16x32xf32> to vector<16x8xf32>
    %51 = vector.extract_strided_slice %14 {offsets = [0, 16], sizes = [16, 8], strides = [1, 1]} : vector<16x32xf32> to vector<16x8xf32>
    %cst_21 = arith.constant dense<0.000000e+00> : vector<16x16xf32>
    %52 = tpu.matmul %49, %50, %cst_21 {dimension_numbers = #tpu.dot_dimension_numbers<[1], [1], [0], [0], [0, 0, 1, 0], [], []>} : vector<16x8xf32>, vector<16x8xf32>, vector<16x16xf32> -> vector<16x16xf32>
    %53 = arith.addf %52, %4 : vector<16x16xf32>
    %cst_22 = arith.constant dense<0xFF800000> : vector<16xf32>
    %54 = vector.multi_reduction <maximumf>, %53, %cst_22 [1] : vector<16x16xf32> to vector<16xf32>
    %55 = vector.shape_cast %54 : vector<16xf32> to vector<16x1xf32>
    %56 = vector.broadcast %55 : vector<16x1xf32> to vector<16x16xf32>
    %57 = arith.subf %53, %56 : vector<16x16xf32>
    %58 = math.exp %57 : vector<16x16xf32>
    %cst_23 = arith.constant dense<0.000000e+00> : vector<16xf32>
    %59 = vector.multi_reduction <add>, %58, %cst_23 [1] : vector<16x16xf32> to vector<16xf32>
    %60 = vector.shape_cast %59 : vector<16xf32> to vector<16x1xf32>
    %61 = tpu.reciprocal %60 {approx = true} : vector<16x1xf32> -> vector<16x1xf32>
    %62 = vector.broadcast %61 : vector<16x1xf32> to vector<16x16xf32>
    %63 = arith.mulf %58, %62 : vector<16x16xf32>
    %cst_24 = arith.constant dense<0.000000e+00> : vector<16x8xf32>
    %64 = tpu.matmul %63, %51, %cst_24 {dimension_numbers = #tpu.dot_dimension_numbers<[1], [0], [0], [1], [0, 0, 1, 1], [], []>} : vector<16x16xf32>, vector<16x8xf32>, vector<16x8xf32> -> vector<16x8xf32>
    %c0_25 = arith.constant 0 : index
    %c16 = arith.constant 16 : index
    %65 = vector.load %arg24[%c0_25, %c16] : memref<16x32xf32, #tpu.memory_space<vmem>>, vector<16x8xf32>
    tpu.vector_store %arg24[%c0_25, %c16], %64 {strides = array<i32>} : memref<16x32xf32, #tpu.memory_space<vmem>>, vector<16x8xf32>,
    %66 = vector.extract_strided_slice %12 {offsets = [0, 24], sizes = [16, 8], strides = [1, 1]} : vector<16x32xf32> to vector<16x8xf32>
    %67 = vector.extract_strided_slice %13 {offsets = [0, 24], sizes = [16, 8], strides = [1, 1]} : vector<16x32xf32> to vector<16x8xf32>
    %68 = vector.extract_strided_slice %14 {offsets = [0, 24], sizes = [16, 8], strides = [1, 1]} : vector<16x32xf32> to vector<16x8xf32>
    %cst_26 = arith.constant dense<0.000000e+00> : vector<16x16xf32>
    %69 = tpu.matmul %66, %67, %cst_26 {dimension_numbers = #tpu.dot_dimension_numbers<[1], [1], [0], [0], [0, 0, 1, 0], [], []>} : vector<16x8xf32>, vector<16x8xf32>, vector<16x16xf32> -> vector<16x16xf32>
    %70 = arith.addf %69, %4 : vector<16x16xf32>
    %cst_27 = arith.constant dense<0xFF800000> : vector<16xf32>
    %71 = vector.multi_reduction <maximumf>, %70, %cst_27 [1] : vector<16x16xf32> to vector<16xf32>
    %72 = vector.shape_cast %71 : vector<16xf32> to vector<16x1xf32>
    %73 = vector.broadcast %72 : vector<16x1xf32> to vector<16x16xf32>
    %74 = arith.subf %70, %73 : vector<16x16xf32>
    %75 = math.exp %74 : vector<16x16xf32>
    %cst_28 = arith.constant dense<0.000000e+00> : vector<16xf32>
    %76 = vector.multi_reduction <add>, %75, %cst_28 [1] : vector<16x16xf32> to vector<16xf32>
    %77 = vector.shape_cast %76 : vector<16xf32> to vector<16x1xf32>
    %78 = tpu.reciprocal %77 {approx = true} : vector<16x1xf32> -> vector<16x1xf32>
    %79 = vector.broadcast %78 : vector<16x1xf32> to vector<16x16xf32>
    %80 = arith.mulf %75, %79 : vector<16x16xf32>
    %cst_29 = arith.constant dense<0.000000e+00> : vector<16x8xf32>
    %81 = tpu.matmul %80, %68, %cst_29 {dimension_numbers = #tpu.dot_dimension_numbers<[1], [0], [0], [1], [0, 0, 1, 1], [], []>} : vector<16x16xf32>, vector<16x8xf32>, vector<16x8xf32> -> vector<16x8xf32>
    %c0_30 = arith.constant 0 : index
    %c24 = arith.constant 24 : index
    %82 = vector.load %arg24[%c0_30, %c24] : memref<16x32xf32, #tpu.memory_space<vmem>>, vector<16x8xf32>
    tpu.vector_store %arg24[%c0_30, %c24], %81 {strides = array<i32>} : memref<16x32xf32, #tpu.memory_space<vmem>>, vector<16x8xf32>,
    %c0_31 = arith.constant 0 : index
    %c0_32 = arith.constant 0 : index
    %83 = vector.load %arg24[%c0_31, %c0_32] : memref<16x32xf32, #tpu.memory_space<vmem>>, vector<16x32xf32>
    %c0_33 = arith.constant 0 : index
    %c0_34 = arith.constant 0 : index
    %c0_35 = arith.constant 0 : index
    %84 = vector.load %arg9[%c0_33, %c0_34, %c0_35] : memref<1x32x32xf32, #tpu.memory_space<vmem>>, vector<1x32x32xf32>
    %85 = vector.shape_cast %84 : vector<1x32x32xf32> to vector<32x32xf32>
    %cst_36 = arith.constant dense<0.000000e+00> : vector<16x32xf32>
    %86 = tpu.matmul %83, %85, %cst_36 {dimension_numbers = #tpu.dot_dimension_numbers<[1], [0], [0], [1], [0, 0, 1, 1], [], []>} : vector<16x32xf32>, vector<32x32xf32>, vector<16x32xf32> -> vector<16x32xf32>
    %c0_37 = arith.constant 0 : index
    %c0_38 = arith.constant 0 : index
    %c0_39 = arith.constant 0 : index
    %87 = vector.load %arg10[%c0_37, %c0_38, %c0_39] : memref<1x1x32xf32, #tpu.memory_space<vmem>>, vector<1x1x32xf32>
    %88 = vector.shape_cast %87 : vector<1x1x32xf32> to vector<1x32xf32>
    %89 = vector.broadcast %88 : vector<1x32xf32> to vector<16x32xf32>
    %90 = arith.addf %86, %89 : vector<16x32xf32>
    %91 = arith.addf %90, %3 : vector<16x32xf32>
    %c0_40 = arith.constant 0 : index
    %c0_41 = arith.constant 0 : index
    %c0_42 = arith.constant 0 : index
    %92 = vector.load %arg11[%c0_40, %c0_41, %c0_42] : memref<1x1x32xf32, #tpu.memory_space<vmem>>, vector<1x1x32xf32>
    %93 = vector.shape_cast %92 : vector<1x1x32xf32> to vector<1x32xf32>
    %c0_43 = arith.constant 0 : index
    %c0_44 = arith.constant 0 : index
    %c0_45 = arith.constant 0 : index
    %94 = vector.load %arg12[%c0_43, %c0_44, %c0_45] : memref<1x1x32xf32, #tpu.memory_space<vmem>>, vector<1x1x32xf32>
    %95 = vector.shape_cast %94 : vector<1x1x32xf32> to vector<1x32xf32>
    %cst_46 = arith.constant dense<0.000000e+00> : vector<16xf32>
    %96 = vector.multi_reduction <add>, %91, %cst_46 [1] : vector<16x32xf32> to vector<16xf32>
    %97 = vector.shape_cast %96 : vector<16xf32> to vector<16x1xf32>
    %cst_47 = arith.constant 3.200000e+01 : f32
    %98 = vector.broadcast %cst_47 : f32 to vector<16x1xf32>
    %99 = arith.divf %97, %98 : vector<16x1xf32>
    %100 = vector.broadcast %99 : vector<16x1xf32> to vector<16x32xf32>
    %101 = arith.subf %91, %100 : vector<16x32xf32>
    %102 = vector.broadcast %99 : vector<16x1xf32> to vector<16x32xf32>
    %103 = arith.subf %91, %102 : vector<16x32xf32>
    %104 = arith.mulf %101, %103 : vector<16x32xf32>
    %cst_48 = arith.constant dense<0.000000e+00> : vector<16xf32>
    %105 = vector.multi_reduction <add>, %104, %cst_48 [1] : vector<16x32xf32> to vector<16xf32>
    %106 = vector.shape_cast %105 : vector<16xf32> to vector<16x1xf32>
    %cst_49 = arith.constant 3.200000e+01 : f32
    %107 = vector.broadcast %cst_49 : f32 to vector<16x1xf32>
    %108 = arith.divf %106, %107 : vector<16x1xf32>
    %109 = vector.broadcast %99 : vector<16x1xf32> to vector<16x32xf32>
    %110 = arith.subf %91, %109 : vector<16x32xf32>
    %cst_50 = arith.constant 9.99999996E-13 : f32
    %111 = vector.broadcast %cst_50 : f32 to vector<16x1xf32>
    %112 = arith.addf %108, %111 : vector<16x1xf32>
    %113 = math.rsqrt %112 : vector<16x1xf32>
    %114 = vector.broadcast %113 : vector<16x1xf32> to vector<16x32xf32>
    %115 = arith.mulf %110, %114 : vector<16x32xf32>
    %116 = vector.broadcast %93 : vector<1x32xf32> to vector<16x32xf32>
    %117 = arith.mulf %115, %116 : vector<16x32xf32>
    %118 = vector.broadcast %95 : vector<1x32xf32> to vector<16x32xf32>
    %119 = arith.addf %117, %118 : vector<16x32xf32>
    %c0_51 = arith.constant 0 : index
    %c0_52 = arith.constant 0 : index
    %c0_53 = arith.constant 0 : index
    %120 = vector.load %arg13[%c0_51, %c0_52, %c0_53] : memref<1x32x64xf32, #tpu.memory_space<vmem>>, vector<1x32x64xf32>
    %121 = vector.shape_cast %120 : vector<1x32x64xf32> to vector<32x64xf32>
    %cst_54 = arith.constant dense<0.000000e+00> : vector<16x64xf32>
    %122 = tpu.matmul %119, %121, %cst_54 {dimension_numbers = #tpu.dot_dimension_numbers<[1], [0], [0], [1], [0, 0, 1, 1], [], []>} : vector<16x32xf32>, vector<32x64xf32>, vector<16x64xf32> -> vector<16x64xf32>
    %c0_55 = arith.constant 0 : index
    %c0_56 = arith.constant 0 : index
    %c0_57 = arith.constant 0 : index
    %123 = vector.load %arg14[%c0_55, %c0_56, %c0_57] : memref<1x1x64xf32, #tpu.memory_space<vmem>>, vector<1x1x64xf32>
    %124 = vector.shape_cast %123 : vector<1x1x64xf32> to vector<1x64xf32>
    %125 = vector.broadcast %124 : vector<1x64xf32> to vector<16x64xf32>
    %126 = arith.addf %122, %125 : vector<16x64xf32>
    %cst_58 = arith.constant 5.000000e-01 : f32
    %127 = vector.broadcast %cst_58 : f32 to vector<16x64xf32>
    %128 = arith.mulf %127, %126 : vector<16x64xf32>
    %cst_59 = arith.constant 4.471500e-02 : f32
    %129 = vector.broadcast %cst_59 : f32 to vector<16x64xf32>
    %130 = arith.mulf %129, %126 : vector<16x64xf32>
    %131 = arith.mulf %130, %126 : vector<16x64xf32>
    %132 = arith.mulf %131, %126 : vector<16x64xf32>
    %133 = arith.addf %126, %132 : vector<16x64xf32>
    %cst_60 = arith.constant 0.797884583 : f32
    %134 = vector.broadcast %cst_60 : f32 to vector<16x64xf32>
    %135 = arith.mulf %134, %133 : vector<16x64xf32>
    %136 = math.tanh %135 : vector<16x64xf32>
    %cst_61 = arith.constant 1.000000e+00 : f32
    %137 = vector.broadcast %cst_61 : f32 to vector<16x64xf32>
    %138 = arith.addf %137, %136 : vector<16x64xf32>
    %139 = arith.mulf %128, %138 : vector<16x64xf32>
    %c0_62 = arith.constant 0 : index
    %c0_63 = arith.constant 0 : index
    %c0_64 = arith.constant 0 : index
    %140 = vector.load %arg15[%c0_62, %c0_63, %c0_64] : memref<1x64x32xf32, #tpu.memory_space<vmem>>, vector<1x64x32xf32>
    %141 = vector.shape_cast %140 : vector<1x64x32xf32> to vector<64x32xf32>
    %cst_65 = arith.constant dense<0.000000e+00> : vector<16x32xf32>
    %142 = tpu.matmul %139, %141, %cst_65 {dimension_numbers = #tpu.dot_dimension_numbers<[1], [0], [0], [1], [0, 0, 1, 1], [], []>} : vector<16x64xf32>, vector<64x32xf32>, vector<16x32xf32> -> vector<16x32xf32>
    %c0_66 = arith.constant 0 : index
    %c0_67 = arith.constant 0 : index
    %c0_68 = arith.constant 0 : index
    %143 = vector.load %arg16[%c0_66, %c0_67, %c0_68] : memref<1x1x32xf32, #tpu.memory_space<vmem>>, vector<1x1x32xf32>
    %144 = vector.shape_cast %143 : vector<1x1x32xf32> to vector<1x32xf32>
    %145 = vector.broadcast %144 : vector<1x32xf32> to vector<16x32xf32>
    %146 = arith.addf %142, %145 : vector<16x32xf32>
    %147 = arith.addf %146, %119 : vector<16x32xf32>
    %c0_69 = arith.constant 0 : index
    %c0_70 = arith.constant 0 : index
    %c0_71 = arith.constant 0 : index
    %148 = vector.load %arg17[%c0_69, %c0_70, %c0_71] : memref<1x1x32xf32, #tpu.memory_space<vmem>>, vector<1x1x32xf32>
    %149 = vector.shape_cast %148 : vector<1x1x32xf32> to vector<1x32xf32>
    %c0_72 = arith.constant 0 : index
    %c0_73 = arith.constant 0 : index
    %c0_74 = arith.constant 0 : index
    %150 = vector.load %arg18[%c0_72, %c0_73, %c0_74] : memref<1x1x32xf32, #tpu.memory_space<vmem>>, vector<1x1x32xf32>
    %151 = vector.shape_cast %150 : vector<1x1x32xf32> to vector<1x32xf32>
    %cst_75 = arith.constant dense<0.000000e+00> : vector<16xf32>
    %152 = vector.multi_reduction <add>, %147, %cst_75 [1] : vector<16x32xf32> to vector<16xf32>
    %153 = vector.shape_cast %152 : vector<16xf32> to vector<16x1xf32>
    %cst_76 = arith.constant 3.200000e+01 : f32
    %154 = vector.broadcast %cst_76 : f32 to vector<16x1xf32>
    %155 = arith.divf %153, %154 : vector<16x1xf32>
    %156 = vector.broadcast %155 : vector<16x1xf32> to vector<16x32xf32>
    %157 = arith.subf %147, %156 : vector<16x32xf32>
    %158 = vector.broadcast %155 : vector<16x1xf32> to vector<16x32xf32>
    %159 = arith.subf %147, %158 : vector<16x32xf32>
    %160 = arith.mulf %157, %159 : vector<16x32xf32>
    %cst_77 = arith.constant dense<0.000000e+00> : vector<16xf32>
    %161 = vector.multi_reduction <add>, %160, %cst_77 [1] : vector<16x32xf32> to vector<16xf32>
    %162 = vector.shape_cast %161 : vector<16xf32> to vector<16x1xf32>
    %cst_78 = arith.constant 3.200000e+01 : f32
    %163 = vector.broadcast %cst_78 : f32 to vector<16x1xf32>
    %164 = arith.divf %162, %163 : vector<16x1xf32>
    %165 = vector.broadcast %155 : vector<16x1xf32> to vector<16x32xf32>
    %166 = arith.subf %147, %165 : vector<16x32xf32>
    %cst_79 = arith.constant 9.99999996E-13 : f32
    %167 = vector.broadcast %cst_79 : f32 to vector<16x1xf32>
    %168 = arith.addf %164, %167 : vector<16x1xf32>
    %169 = math.rsqrt %168 : vector<16x1xf32>
    %170 = vector.broadcast %169 : vector<16x1xf32> to vector<16x32xf32>
    %171 = arith.mulf %166, %170 : vector<16x32xf32>
    %172 = vector.broadcast %149 : vector<1x32xf32> to vector<16x32xf32>
    %173 = arith.mulf %171, %172 : vector<16x32xf32>
    %174 = vector.broadcast %151 : vector<1x32xf32> to vector<16x32xf32>
    %175 = arith.addf %173, %174 : vector<16x32xf32>
    %c0_80 = arith.constant 0 : index
    %c0_81 = arith.constant 0 : index
    %176 = vector.load %arg22[%c0_80, %c0_81] : memref<16x32xf32, #tpu.memory_space<vmem>>, vector<16x32xf32>
    tpu.vector_store %arg22[%c0_80, %c0_81], %175 {strides = array<i32>} : memref<16x32xf32, #tpu.memory_space<vmem>>, vector<16x32xf32>,
    %c1_i32 = arith.constant 1 : i32
    %177 = arith.cmpi eq, %arg0, %c1_i32 : i32
    %178 = arith.extui %177 : i1 to i32
    %c0_i32_82 = arith.constant 0 : i32
    %179 = arith.cmpi ne, %178, %c0_i32_82 : i32
    scf.if %179 {
      %c0_83 = arith.constant 0 : index
      %c0_84 = arith.constant 0 : index
      %180 = vector.load %arg4[%c0_83, %c0_84] : memref<2x16xf32, #tpu.memory_space<vmem>>, vector<2x16xf32>
      %cst_85 = arith.constant dense<0.000000e+00> : vector<2x32xf32>
      %181 = tpu.matmul %180, %175, %cst_85 {dimension_numbers = #tpu.dot_dimension_numbers<[1], [0], [0], [1], [0, 0, 1, 1], [], []>} : vector<2x16xf32>, vector<16x32xf32>, vector<2x32xf32> -> vector<2x32xf32>
      %c0_86 = arith.constant 0 : index
      %c0_87 = arith.constant 0 : index
      %182 = vector.load %arg19[%c0_86, %c0_87] : memref<32x32xf32, #tpu.memory_space<vmem>>, vector<32x32xf32>
      %cst_88 = arith.constant dense<0.000000e+00> : vector<2x32xf32>
      %183 = tpu.matmul %181, %182, %cst_88 {dimension_numbers = #tpu.dot_dimension_numbers<[1], [0], [0], [1], [0, 0, 1, 1], [], []>} : vector<2x32xf32>, vector<32x32xf32>, vector<2x32xf32> -> vector<2x32xf32>
      %c0_89 = arith.constant 0 : index
      %c0_90 = arith.constant 0 : index
      %184 = vector.load %arg20[%c0_89, %c0_90] : memref<1x32xf32, #tpu.memory_space<vmem>>, vector<1x32xf32>
      %185 = vector.broadcast %184 : vector<1x32xf32> to vector<2x32xf32>
      %186 = arith.addf %183, %185 : vector<2x32xf32>
      %187 = math.tanh %186 : vector<2x32xf32>
      %c0_91 = arith.constant 0 : index
      %c0_92 = arith.constant 0 : index
      %188 = vector.load %arg21[%c0_91, %c0_92] : memref<2x32xf32, #tpu.memory_space<vmem>>, vector<2x32xf32>
      tpu.vector_store %arg21[%c0_91, %c0_92], %187 {strides = array<i32>} : memref<2x32xf32, #tpu.memory_space<vmem>>, vector<2x32xf32>,
    } else {
    }
    return
  }
  func.func @transform_0(%arg0: i32) -> (i32, i32) {
    %c0_i32 = arith.constant 0 : i32
    %c0_i32_0 = arith.constant 0 : i32
    %c0_i32_1 = arith.constant 0 : i32
    return %c0_i32, %c0_i32_0 : i32, i32
  }
  func.func @transform_1(%arg0: i32) -> (i32, i32) {
    %c0_i32 = arith.constant 0 : i32
    %c0_i32_0 = arith.constant 0 : i32
    %c0_i32_1 = arith.constant 0 : i32
    return %c0_i32, %c0_i32_0 : i32, i32
  }
  func.func @transform_2(%arg0: i32) -> (i32, i32) {
    %c0_i32 = arith.constant 0 : i32
    %c0_i32_0 = arith.constant 0 : i32
    %c0_i32_1 = arith.constant 0 : i32
    return %c0_i32, %c0_i32_0 : i32, i32
  }
  func.func @transform_3(%arg0: i32) -> (i32, i32) {
    %c0_i32 = arith.constant 0 : i32
    %c0_i32_0 = arith.constant 0 : i32
    %c0_i32_1 = arith.constant 0 : i32
    return %c0_i32, %c0_i32_0 : i32, i32
  }
  func.func @transform_4(%arg0: i32) -> (i32, i32) {
    %c0_i32 = arith.constant 0 : i32
    %c0_i32_0 = arith.constant 0 : i32
    %c0_i32_1 = arith.constant 0 : i32
    return %c0_i32, %c0_i32_0 : i32, i32
  }
  func.func @transform_5(%arg0: i32) -> (i32, i32) {
    %c0_i32 = arith.constant 0 : i32
    %c0_i32_0 = arith.constant 0 : i32
    %c0_i32_1 = arith.constant 0 : i32
    return %c0_i32, %c0_i32_0 : i32, i32
  }
  func.func @transform_6(%arg0: i32) -> (i32, i32, i32) {
    %c0_i32 = arith.constant 0 : i32
    %c0_i32_0 = arith.constant 0 : i32
    %c0_i32_1 = arith.constant 0 : i32
    return %arg0, %c0_i32, %c0_i32_0 : i32, i32, i32
  }
  func.func @transform_7(%arg0: i32) -> (i32, i32, i32) {
    %c0_i32 = arith.constant 0 : i32
    %c0_i32_0 = arith.constant 0 : i32
    %c0_i32_1 = arith.constant 0 : i32
    return %arg0, %c0_i32, %c0_i32_0 : i32, i32, i32
  }
  func.func @transform_8(%arg0: i32) -> (i32, i32, i32) {
    %c0_i32 = arith.constant 0 : i32
    %c0_i32_0 = arith.constant 0 : i32
    %c0_i32_1 = arith.constant 0 : i32
    return %arg0, %c0_i32, %c0_i32_0 : i32, i32, i32
  }
  func.func @transform_9(%arg0: i32) -> (i32, i32, i32) {
    %c0_i32 = arith.constant 0 : i32
    %c0_i32_0 = arith.constant 0 : i32
    %c0_i32_1 = arith.constant 0 : i32
    return %arg0, %c0_i32, %c0_i32_0 : i32, i32, i32
  }
  func.func @transform_10(%arg0: i32) -> (i32, i32, i32) {
    %c0_i32 = arith.constant 0 : i32
    %c0_i32_0 = arith.constant 0 : i32
    %c0_i32_1 = arith.constant 0 : i32
    return %arg0, %c0_i32, %c0_i32_0 : i32, i32, i32
  }
  func.func @transform_11(%arg0: i32) -> (i32, i32, i32) {
    %c0_i32 = arith.constant 0 : i32
    %c0_i32_0 = arith.constant 0 : i32
    %c0_i32_1 = arith.constant 0 : i32
    return %arg0, %c0_i32, %c0_i32_0 : i32, i32, i32
  }
  func.func @transform_12(%arg0: i32) -> (i32, i32, i32) {
    %c0_i32 = arith.constant 0 : i32
    %c0_i32_0 = arith.constant 0 : i32
    %c0_i32_1 = arith.constant 0 : i32
    return %arg0, %c0_i32, %c0_i32_0 : i32, i32, i32
  }
  func.func @transform_13(%arg0: i32) -> (i32, i32, i32) {
    %c0_i32 = arith.constant 0 : i32
    %c0_i32_0 = arith.constant 0 : i32
    %c0_i32_1 = arith.constant 0 : i32
    return %arg0, %c0_i32, %c0_i32_0 : i32, i32, i32
  }
  func.func @transform_14(%arg0: i32) -> (i32, i32, i32) {
    %c0_i32 = arith.constant 0 : i32
    %c0_i32_0 = arith.constant 0 : i32
    %c0_i32_1 = arith.constant 0 : i32
    return %arg0, %c0_i32, %c0_i32_0 : i32, i32, i32
  }
  func.func @transform_15(%arg0: i32) -> (i32, i32, i32) {
    %c0_i32 = arith.constant 0 : i32
    %c0_i32_0 = arith.constant 0 : i32
    %c0_i32_1 = arith.constant 0 : i32
    return %arg0, %c0_i32, %c0_i32_0 : i32, i32, i32
  }
  func.func @transform_16(%arg0: i32) -> (i32, i32, i32) {
    %c0_i32 = arith.constant 0 : i32
    %c0_i32_0 = arith.constant 0 : i32
    %c0_i32_1 = arith.constant 0 : i32
    return %arg0, %c0_i32, %c0_i32_0 : i32, i32, i32
  }
  func.func @transform_17(%arg0: i32) -> (i32, i32, i32) {
    %c0_i32 = arith.constant 0 : i32
    %c0_i32_0 = arith.constant 0 : i32
    %c0_i32_1 = arith.constant 0 : i32
    return %arg0, %c0_i32, %c0_i32_0 : i32, i32, i32
  }
  func.func @transform_18(%arg0: i32) -> (i32, i32) {
    %c0_i32 = arith.constant 0 : i32
    %c0_i32_0 = arith.constant 0 : i32
    %c0_i32_1 = arith.constant 0 : i32
    return %c0_i32, %c0_i32_0 : i32, i32
  }
  func.func @transform_19(%arg0: i32) -> (i32, i32) {
    %c0_i32 = arith.constant 0 : i32
    %c0_i32_0 = arith.constant 0 : i32
    %c0_i32_1 = arith.constant 0 : i32
    return %c0_i32, %c0_i32_0 : i32, i32
  }
  func.func @transform_20(%arg0: i32) -> (i32, i32) {
    %c0_i32 = arith.constant 0 : i32
    %c0_i32_0 = arith.constant 0 : i32
    %c0_i32_1 = arith.constant 0 : i32
    return %c0_i32, %c0_i32_0 : i32, i32
  }
}

</mosaic_0001>

<llo_original>
// kernel: tpu_custom_call.1
$region0: #{tpu_custom_call.1}
  #allocation0 [shape = 'u32[]', space=smem, size = 0x4, offset = 0x4, fixed_abs, tag = 'smem constant byte address 0x4 - core index']
  #allocation1 [shape = 'u32[72,128]{1,0:T(1,128)}', space=vmem, size = 0x9000, scoped, tag = 'internal scratch']
  #allocation2 [shape = 'f32[16,32]{1,0:T(8,128)}', space=vmem, size = 0x2000, scoped, tag = 'scratch operand']
  #allocation3 [shape = 'f32[16,16]{1,0:T(8,128)}', space=vmem, size = 0x2000, scoped, tag = 'scratch operand']
  #allocation4 [shape = 'f32[16,32]{1,0:T(8,128)}', space=vmem, size = 0x2000, scoped, tag = 'scratch operand']
  %s0 = inlined_call_operand.hbm [shape: f32[16,32], index: 0, kind: input, shape index: {}]
  %s1 = inlined_call_operand.vmem [shape: s32[16,1], index: 1, kind: input, shape index: {}]
  %s2 = inlined_call_operand.hbm [shape: s32[1,16], index: 2, kind: input, shape index: {}]
  %s3 = inlined_call_operand.vmem [shape: f32[2,16], index: 3, kind: input, shape index: {}]
  %s4 = inlined_call_operand.hbm [shape: f32[1,32], index: 4, kind: input, shape index: {}]
  %s5 = inlined_call_operand.hbm [shape: f32[1,32], index: 5, kind: input, shape index: {}]
  %s6 = inlined_call_operand.vmem [shape: f32[2,32,96], index: 6, kind: input, shape index: {}]
  %s7 = inlined_call_operand.hbm [shape: f32[2,1,96], index: 7, kind: input, shape index: {}]
  %s8 = inlined_call_operand.vmem [shape: f32[2,32,32], index: 8, kind: input, shape index: {}]
  %s9 = inlined_call_operand.hbm [shape: f32[2,1,32], index: 9, kind: input, shape index: {}]
  %s10 = inlined_call_operand.hbm [shape: f32[2,1,32], index: 10, kind: input, shape index: {}]
  %s11 = inlined_call_operand.hbm [shape: f32[2,1,32], index: 11, kind: input, shape index: {}]
  %s12 = inlined_call_operand.vmem [shape: f32[2,32,64], index: 12, kind: input, shape index: {}]
  %s13 = inlined_call_operand.hbm [shape: f32[2,1,64], index: 13, kind: input, shape index: {}]
  %s14 = inlined_call_operand.vmem [shape: f32[2,64,32], index: 14, kind: input, shape index: {}]
  %s15 = inlined_call_operand.hbm [shape: f32[2,1,32], index: 15, kind: input, shape index: {}]
  %s16 = inlined_call_operand.hbm [shape: f32[2,1,32], index: 16, kind: input, shape index: {}]
  %s17 = inlined_call_operand.hbm [shape: f32[2,1,32], index: 17, kind: input, shape index: {}]
  %s18 = inlined_call_operand.vmem [shape: f32[32,32], index: 18, kind: input, shape index: {}]
  %s19 = inlined_call_operand.hbm [shape: f32[1,32], index: 19, kind: input, shape index: {}]
  %s20 = inlined_call_operand.hbm [shape: f32[2,32], index: 20, kind: output, shape index: {}]
  %s21 = sld [smem:[#allocation0]]
  $region173: #{tpu_custom_call.1} parent=0
    _
  %s23 = ssub.s32 1, %s21
  %s24 = scalar_select 0, %s23, %s21
  $region1: #{tpu_custom_call.1} parent=0
    #allocation5 [shape = 'u8[8192]{0}', space=vmem, size = 0x2000, scoped, tag = 'input window, operand 0, single buffered']
    #allocation6 [shape = 's32[2]{0}', space=sflag, size = 0x8, scoped, tag = 'scoped memory for tpu_custom_call.1']
    #allocation7 [shape = 's32[2]{0}', space=sflag, size = 0x8, scoped, tag = 'scoped memory for tpu_custom_call.1']
    #allocation8 [shape = 'u8[512]{0}', space=vmem, size = 0x400, scoped, tag = 'input window, operand 2, single buffered']
    #allocation9 [shape = 's32[1]{0}', space=sflag, size = 0x4, scoped, tag = 'scoped memory for tpu_custom_call.1']
    #allocation10 [shape = 'u8[512]{0}', space=vmem, size = 0x400, scoped, tag = 'input window, operand 4, single buffered']
    #allocation11 [shape = 'u8[512]{0}', space=vmem, size = 0x400, scoped, tag = 'input window, operand 5, single buffered']
    #allocation12 [shape = 's32[1]{0}', space=sflag, size = 0x4, scoped, tag = 'scoped memory for tpu_custom_call.1']
    #allocation13 [shape = 'u8[1024]{0}', space=vmem, size = 0x400, scoped, tag = 'input window, operand 7']
    #allocation14 [shape = 'u8[1024]{0}', space=vmem, size = 0x400, scoped, tag = 'input window, operand 9']
    #allocation15 [shape = 'u8[1024]{0}', space=vmem, size = 0x400, scoped, tag = 'input window, operand 10']
    #allocation16 [shape = 'u8[1024]{0}', space=vmem, size = 0x400, scoped, tag = 'input window, operand 11']
    #allocation17 [shape = 'u8[1024]{0}', space=vmem, size = 0x400, scoped, tag = 'input window, operand 13']
    #allocation18 [shape = 'u8[1024]{0}', space=vmem, size = 0x400, scoped, tag = 'input window, operand 15']
    #allocation19 [shape = 'u8[1024]{0}', space=vmem, size = 0x400, scoped, tag = 'input window, operand 16']
    #allocation20 [shape = 'u8[1024]{0}', space=vmem, size = 0x400, scoped, tag = 'input window, operand 17']
    #allocation21 [shape = 'u8[512]{0}', space=vmem, size = 0x400, scoped, tag = 'input window, operand 19, single buffered']
    #allocation22 [shape = 'u8[1024]{0}', space=vmem, size = 0x400, scoped, tag = 'output window, operand 0, single buffered']
    %25 = vsyncpa [#allocation6], 0
    %26 = vsyncpa [#allocation9], 0
    %27 = vsyncpa [#allocation12], 0
    %28 = vsyncpa [#allocation7], 0
    loop: start=0, step=1, limit=4
    $region2: #{tpu_custom_call.1} parent=1 // loop_pre_header
      _
    $region3: #{tpu_custom_call.1} parent=1 // loop_header
      %s30 = sphi 0, %s34
      %p31 = scmp.ge.s32.totalorder %s30, 4
      %s38 = sphi 0, %s38
      %s40 = sphi 0, %s38
      %s41 = sphi 0, %s40
      %s55 = sphi 0, %s41
      %s59 = sphi 0, %s59
      %s61 = sphi 0, %s59
      %s62 = sphi 0, %s61
      %s76 = sphi 0, %s62
      %s80 = sphi 0, %s80
      %s82 = sphi 0, %s80
      %s83 = sphi 0, %s82
      %s97 = sphi 0, %s83
      %s101 = sphi 0, %s101
      %s103 = sphi 0, %s101
      %s104 = sphi 0, %s103
      %s118 = sphi 0, %s104
      %s122 = sphi 0, %s122
      %s124 = sphi 0, %s122
      %s125 = sphi 0, %s124
      %s139 = sphi 0, %s125
      %s143 = sphi 0, %s143
      %s145 = sphi 0, %s143
      %s146 = sphi 0, %s145
      %s160 = sphi 0, %s146
      %s166 = sphi 0, %s168
      %s169 = sphi 0, %s166
      %s170 = sphi 0, %s169
      %s186 = sphi 0, %s170
      %s192 = sphi 0, %s194
      %s195 = sphi 0, %s192
      %s196 = sphi 0, %s195
      %s212 = sphi 0, %s196
      %s218 = sphi 0, %s220
      %s221 = sphi 0, %s218
      %s222 = sphi 0, %s221
      %s238 = sphi 0, %s222
      %s244 = sphi 0, %s246
      %s247 = sphi 0, %s244
      %s248 = sphi 0, %s247
      %s264 = sphi 0, %s248
      %s270 = sphi 0, %s272
      %s273 = sphi 0, %s270
      %s274 = sphi 0, %s273
      %s290 = sphi 0, %s274
      %s296 = sphi 0, %s298
      %s299 = sphi 0, %s296
      %s300 = sphi 0, %s299
      %s316 = sphi 0, %s300
      %s322 = sphi 0, %s324
      %s325 = sphi 0, %s322
      %s326 = sphi 0, %s325
      %s342 = sphi 0, %s326
      %s348 = sphi 0, %s350
      %s351 = sphi 0, %s348
      %s352 = sphi 0, %s351
      %s368 = sphi 0, %s352
      %s374 = sphi 0, %s376
      %s377 = sphi 0, %s374
      %s378 = sphi 0, %s377
      %s394 = sphi 0, %s378
      %s400 = sphi 0, %s402
      %s403 = sphi 0, %s400
      %s404 = sphi 0, %s403
      %s420 = sphi 0, %s404
      %s426 = sphi 0, %s428
      %s429 = sphi 0, %s426
      %s430 = sphi 0, %s429
      %s446 = sphi 0, %s430
      %s452 = sphi 0, %s454
      %s455 = sphi 0, %s452
      %s456 = sphi 0, %s455
      %s472 = sphi 0, %s456
      %s476 = sphi 0, %s476
      %s478 = sphi 0, %s476
      %s479 = sphi 0, %s478
      %s493 = sphi 0, %s479
      %s497 = sphi 0, %s497
      %s499 = sphi 0, %s497
      %s500 = sphi 0, %s499
      %s514 = sphi 0, %s500
      %s518 = sphi 0, %s518
      %s520 = sphi 0, %s518
      %s521 = sphi 0, %s520
      %s535 = sphi 0, %s521
    $region4: #{tpu_custom_call.1} parent=1 // loop_header_branch
      %33 = sbr.rel (%p31) target = $region8
    $region5: #{tpu_custom_call.1} parent=1 // loop_body
      %s35 = ssub.s32 %s30, 1
      %s36 = ssub.s32 %s30, 2
      %s37 = sadd.s32 %s30, 1
      %s39 = sadd.s32 %s38, 1
      %p42 = scmp.eq.s32.totalorder %s30, 1
      %p43 = scmp.ne.s32.totalorder %s38, %s40
      %p44 = scmp.eq.s32.totalorder %s30, 0
      %p45 = por %p43, %p44
      %p46 = scmp.ne.s32.totalorder %s38, %s40
      %p47 = scmp.eq.s32.totalorder %s35, 1
      %p48 = por %p46, %p47
      %p49 = scmp.ne.s32.totalorder %s40, %s41
      %p50 = scmp.eq.s32.totalorder %s35, 0
      %p51 = por %p49, %p50
      %p52 = scmp.ne.s32.totalorder %s40, %s41
      %p53 = scmp.eq.s32.totalorder %s36, 1
      %p54 = por %p52, %p53
      %p56 = scmp.ne.s32.totalorder %s41, %s55
      %p57 = scmp.eq.s32.totalorder %s36, 0
      %p58 = por %p56, %p57
      %s60 = sadd.s32 %s59, 1
      %p63 = scmp.eq.s32.totalorder %s30, 1
      %p64 = scmp.ne.s32.totalorder %s59, %s61
      %p65 = scmp.eq.s32.totalorder %s30, 0
      %p66 = por %p64, %p65
      %p67 = scmp.ne.s32.totalorder %s59, %s61
      %p68 = scmp.eq.s32.totalorder %s35, 1
      %p69 = por %p67, %p68
      %p70 = scmp.ne.s32.totalorder %s61, %s62
      %p71 = scmp.eq.s32.totalorder %s35, 0
      %p72 = por %p70, %p71
      %p73 = scmp.ne.s32.totalorder %s61, %s62
      %p74 = scmp.eq.s32.totalorder %s36, 1
      %p75 = por %p73, %p74
      %p77 = scmp.ne.s32.totalorder %s62, %s76
      %p78 = scmp.eq.s32.totalorder %s36, 0
      %p79 = por %p77, %p78
      %s81 = sadd.s32 %s80, 1
      %p84 = scmp.eq.s32.totalorder %s30, 1
      %p85 = scmp.ne.s32.totalorder %s80, %s82
      %p86 = scmp.eq.s32.totalorder %s30, 0
      %p87 = por %p85, %p86
      %p88 = scmp.ne.s32.totalorder %s80, %s82
      %p89 = scmp.eq.s32.totalorder %s35, 1
      %p90 = por %p88, %p89
      %p91 = scmp.ne.s32.totalorder %s82, %s83
      %p92 = scmp.eq.s32.totalorder %s35, 0
      %p93 = por %p91, %p92
      %p94 = scmp.ne.s32.totalorder %s82, %s83
      %p95 = scmp.eq.s32.totalorder %s36, 1
      %p96 = por %p94, %p95
      %p98 = scmp.ne.s32.totalorder %s83, %s97
      %p99 = scmp.eq.s32.totalorder %s36, 0
      %p100 = por %p98, %p99
      %s102 = sadd.s32 %s101, 1
      %p105 = scmp.eq.s32.totalorder %s30, 1
      %p106 = scmp.ne.s32.totalorder %s101, %s103
      %p107 = scmp.eq.s32.totalorder %s30, 0
      %p108 = por %p106, %p107
      %p109 = scmp.ne.s32.totalorder %s101, %s103
      %p110 = scmp.eq.s32.totalorder %s35, 1
      %p111 = por %p109, %p110
      %p112 = scmp.ne.s32.totalorder %s103, %s104
      %p113 = scmp.eq.s32.totalorder %s35, 0
      %p114 = por %p112, %p113
      %p115 = scmp.ne.s32.totalorder %s103, %s104
      %p116 = scmp.eq.s32.totalorder %s36, 1
      %p117 = por %p115, %p116
      %p119 = scmp.ne.s32.totalorder %s104, %s118
      %p120 = scmp.eq.s32.totalorder %s36, 0
      %p121 = por %p119, %p120
      %s123 = sadd.s32 %s122, 1
      %p126 = scmp.eq.s32.totalorder %s30, 1
      %p127 = scmp.ne.s32.totalorder %s122, %s124
      %p128 = scmp.eq.s32.totalorder %s30, 0
      %p129 = por %p127, %p128
      %p130 = scmp.ne.s32.totalorder %s122, %s124
      %p131 = scmp.eq.s32.totalorder %s35, 1
      %p132 = por %p130, %p131
      %p133 = scmp.ne.s32.totalorder %s124, %s125
      %p134 = scmp.eq.s32.totalorder %s35, 0
      %p135 = por %p133, %p134
      %p136 = scmp.ne.s32.totalorder %s124, %s125
      %p137 = scmp.eq.s32.totalorder %s36, 1
      %p138 = por %p136, %p137
      %p140 = scmp.ne.s32.totalorder %s125, %s139
      %p141 = scmp.eq.s32.totalorder %s36, 0
      %p142 = por %p140, %p141
      %s144 = sadd.s32 %s143, 1
      %p147 = scmp.eq.s32.totalorder %s30, 1
      %p148 = scmp.ne.s32.totalorder %s143, %s145
      %p149 = scmp.eq.s32.totalorder %s30, 0
      %p150 = por %p148, %p149
      %p151 = scmp.ne.s32.totalorder %s143, %s145
      %p152 = scmp.eq.s32.totalorder %s35, 1
      %p153 = por %p151, %p152
      %p154 = scmp.ne.s32.totalorder %s145, %s146
      %p155 = scmp.eq.s32.totalorder %s35, 0
      %p156 = por %p154, %p155
      %p157 = scmp.ne.s32.totalorder %s145, %s146
      %p158 = scmp.eq.s32.totalorder %s36, 1
      %p159 = por %p157, %p158
      %p161 = scmp.ne.s32.totalorder %s146, %s160
      %p162 = scmp.eq.s32.totalorder %s36, 0
      %p163 = por %p161, %p162
      %s164 = ssub.s32 %s30, %s37
      %p165 = scmp.eq.s32.totalorder %s164, 0
      %s167 = sadd.s32 %s166, 1
      %s168 = scalar_select %p165, %s166, %s167
      %p171 = pneg %p165
      %p172 = scmp.eq.s32.totalorder %s30, 1
      %p173 = por %p171, %p172
      %p174 = scmp.ne.s32.totalorder %s166, %s169
      %p175 = scmp.eq.s32.totalorder %s30, 0
      %p176 = por %p174, %p175
      %p177 = scmp.ne.s32.totalorder %s166, %s169
      %p178 = scmp.eq.s32.totalorder %s35, 1
      %p179 = por %p177, %p178
      %p180 = scmp.ne.s32.totalorder %s169, %s170
      %p181 = scmp.eq.s32.totalorder %s35, 0
      %p182 = por %p180, %p181
      %p183 = scmp.ne.s32.totalorder %s169, %s170
      %p184 = scmp.eq.s32.totalorder %s36, 1
      %p185 = por %p183, %p184
      %p187 = scmp.ne.s32.totalorder %s170, %s186
      %p188 = scmp.eq.s32.totalorder %s36, 0
      %p189 = por %p187, %p188
      %s190 = ssub.s32 %s30, %s37
      %p191 = scmp.eq.s32.totalorder %s190, 0
      %s193 = sadd.s32 %s192, 1
      %s194 = scalar_select %p191, %s192, %s193
      %p197 = pneg %p191
      %p198 = scmp.eq.s32.totalorder %s30, 1
      %p199 = por %p197, %p198
      %p200 = scmp.ne.s32.totalorder %s192, %s195
      %p201 = scmp.eq.s32.totalorder %s30, 0
      %p202 = por %p200, %p201
      %p203 = scmp.ne.s32.totalorder %s192, %s195
      %p204 = scmp.eq.s32.totalorder %s35, 1
      %p205 = por %p203, %p204
      %p206 = scmp.ne.s32.totalorder %s195, %s196
      %p207 = scmp.eq.s32.totalorder %s35, 0
      %p208 = por %p206, %p207
      %p209 = scmp.ne.s32.totalorder %s195, %s196
      %p210 = scmp.eq.s32.totalorder %s36, 1
      %p211 = por %p209, %p210
      %p213 = scmp.ne.s32.totalorder %s196, %s212
      %p214 = scmp.eq.s32.totalorder %s36, 0
      %p215 = por %p213, %p214
      %s216 = ssub.s32 %s30, %s37
      %p217 = scmp.eq.s32.totalorder %s216, 0
      %s219 = sadd.s32 %s218, 1
      %s220 = scalar_select %p217, %s218, %s219
      %p223 = pneg %p217
      %p224 = scmp.eq.s32.totalorder %s30, 1
      %p225 = por %p223, %p224
      %p226 = scmp.ne.s32.totalorder %s218, %s221
      %p227 = scmp.eq.s32.totalorder %s30, 0
      %p228 = por %p226, %p227
      %p229 = scmp.ne.s32.totalorder %s218, %s221
      %p230 = scmp.eq.s32.totalorder %s35, 1
      %p231 = por %p229, %p230
      %p232 = scmp.ne.s32.totalorder %s221, %s222
      %p233 = scmp.eq.s32.totalorder %s35, 0
      %p234 = por %p232, %p233
      %p235 = scmp.ne.s32.totalorder %s221, %s222
      %p236 = scmp.eq.s32.totalorder %s36, 1
      %p237 = por %p235, %p236
      %p239 = scmp.ne.s32.totalorder %s222, %s238
      %p240 = scmp.eq.s32.totalorder %s36, 0
      %p241 = por %p239, %p240
      %s242 = ssub.s32 %s30, %s37
      %p243 = scmp.eq.s32.totalorder %s242, 0
      %s245 = sadd.s32 %s244, 1
      %s246 = scalar_select %p243, %s244, %s245
      %p249 = pneg %p243
      %p250 = scmp.eq.s32.totalorder %s30, 1
      %p251 = por %p249, %p250
      %p252 = scmp.ne.s32.totalorder %s244, %s247
      %p253 = scmp.eq.s32.totalorder %s30, 0
      %p254 = por %p252, %p253
      %p255 = scmp.ne.s32.totalorder %s244, %s247
      %p256 = scmp.eq.s32.totalorder %s35, 1
      %p257 = por %p255, %p256
      %p258 = scmp.ne.s32.totalorder %s247, %s248
      %p259 = scmp.eq.s32.totalorder %s35, 0
      %p260 = por %p258, %p259
      %p261 = scmp.ne.s32.totalorder %s247, %s248
      %p262 = scmp.eq.s32.totalorder %s36, 1
      %p263 = por %p261, %p262
      %p265 = scmp.ne.s32.totalorder %s248, %s264
      %p266 = scmp.eq.s32.totalorder %s36, 0
      %p267 = por %p265, %p266
      %s268 = ssub.s32 %s30, %s37
      %p269 = scmp.eq.s32.totalorder %s268, 0
      %s271 = sadd.s32 %s270, 1
      %s272 = scalar_select %p269, %s270, %s271
      %p275 = pneg %p269
      %p276 = scmp.eq.s32.totalorder %s30, 1
      %p277 = por %p275, %p276
      %p278 = scmp.ne.s32.totalorder %s270, %s273
      %p279 = scmp.eq.s32.totalorder %s30, 0
      %p280 = por %p278, %p279
      %p281 = scmp.ne.s32.totalorder %s270, %s273
      %p282 = scmp.eq.s32.totalorder %s35, 1
      %p283 = por %p281, %p282
      %p284 = scmp.ne.s32.totalorder %s273, %s274
      %p285 = scmp.eq.s32.totalorder %s35, 0
      %p286 = por %p284, %p285
      %p287 = scmp.ne.s32.totalorder %s273, %s274
      %p288 = scmp.eq.s32.totalorder %s36, 1
      %p289 = por %p287, %p288
      %p291 = scmp.ne.s32.totalorder %s274, %s290
      %p292 = scmp.eq.s32.totalorder %s36, 0
      %p293 = por %p291, %p292
      %s294 = ssub.s32 %s30, %s37
      %p295 = scmp.eq.s32.totalorder %s294, 0
      %s297 = sadd.s32 %s296, 1
      %s298 = scalar_select %p295, %s296, %s297
      %p301 = pneg %p295
      %p302 = scmp.eq.s32.totalorder %s30, 1
      %p303 = por %p301, %p302
      %p304 = scmp.ne.s32.totalorder %s296, %s299
      %p305 = scmp.eq.s32.totalorder %s30, 0
      %p306 = por %p304, %p305
      %p307 = scmp.ne.s32.totalorder %s296, %s299
      %p308 = scmp.eq.s32.totalorder %s35, 1
      %p309 = por %p307, %p308
      %p310 = scmp.ne.s32.totalorder %s299, %s300
      %p311 = scmp.eq.s32.totalorder %s35, 0
      %p312 = por %p310, %p311
      %p313 = scmp.ne.s32.totalorder %s299, %s300
      %p314 = scmp.eq.s32.totalorder %s36, 1
      %p315 = por %p313, %p314
      %p317 = scmp.ne.s32.totalorder %s300, %s316
      %p318 = scmp.eq.s32.totalorder %s36, 0
      %p319 = por %p317, %p318
      %s320 = ssub.s32 %s30, %s37
      %p321 = scmp.eq.s32.totalorder %s320, 0
      %s323 = sadd.s32 %s322, 1
      %s324 = scalar_select %p321, %s322, %s323
      %p327 = pneg %p321
      %p328 = scmp.eq.s32.totalorder %s30, 1
      %p329 = por %p327, %p328
      %p330 = scmp.ne.s32.totalorder %s322, %s325
      %p331 = scmp.eq.s32.totalorder %s30, 0
      %p332 = por %p330, %p331
      %p333 = scmp.ne.s32.totalorder %s322, %s325
      %p334 = scmp.eq.s32.totalorder %s35, 1
      %p335 = por %p333, %p334
      %p336 = scmp.ne.s32.totalorder %s325, %s326
      %p337 = scmp.eq.s32.totalorder %s35, 0
      %p338 = por %p336, %p337
      %p339 = scmp.ne.s32.totalorder %s325, %s326
      %p340 = scmp.eq.s32.totalorder %s36, 1
      %p341 = por %p339, %p340
      %p343 = scmp.ne.s32.totalorder %s326, %s342
      %p344 = scmp.eq.s32.totalorder %s36, 0
      %p345 = por %p343, %p344
      %s346 = ssub.s32 %s30, %s37
      %p347 = scmp.eq.s32.totalorder %s346, 0
      %s349 = sadd.s32 %s348, 1
      %s350 = scalar_select %p347, %s348, %s349
      %p353 = pneg %p347
      %p354 = scmp.eq.s32.totalorder %s30, 1
      %p355 = por %p353, %p354
      %p356 = scmp.ne.s32.totalorder %s348, %s351
      %p357 = scmp.eq.s32.totalorder %s30, 0
      %p358 = por %p356, %p357
      %p359 = scmp.ne.s32.totalorder %s348, %s351
      %p360 = scmp.eq.s32.totalorder %s35, 1
      %p361 = por %p359, %p360
      %p362 = scmp.ne.s32.totalorder %s351, %s352
      %p363 = scmp.eq.s32.totalorder %s35, 0
      %p364 = por %p362, %p363
      %p365 = scmp.ne.s32.totalorder %s351, %s352
      %p366 = scmp.eq.s32.totalorder %s36, 1
      %p367 = por %p365, %p366
      %p369 = scmp.ne.s32.totalorder %s352, %s368
      %p370 = scmp.eq.s32.totalorder %s36, 0
      %p371 = por %p369, %p370
      %s372 = ssub.s32 %s30, %s37
      %p373 = scmp.eq.s32.totalorder %s372, 0
      %s375 = sadd.s32 %s374, 1
      %s376 = scalar_select %p373, %s374, %s375
      %p379 = pneg %p373
      %p380 = scmp.eq.s32.totalorder %s30, 1
      %p381 = por %p379, %p380
      %p382 = scmp.ne.s32.totalorder %s374, %s377
      %p383 = scmp.eq.s32.totalorder %s30, 0
      %p384 = por %p382, %p383
      %p385 = scmp.ne.s32.totalorder %s374, %s377
      %p386 = scmp.eq.s32.totalorder %s35, 1
      %p387 = por %p385, %p386
      %p388 = scmp.ne.s32.totalorder %s377, %s378
      %p389 = scmp.eq.s32.totalorder %s35, 0
      %p390 = por %p388, %p389
      %p391 = scmp.ne.s32.totalorder %s377, %s378
      %p392 = scmp.eq.s32.totalorder %s36, 1
      %p393 = por %p391, %p392
      %p395 = scmp.ne.s32.totalorder %s378, %s394
      %p396 = scmp.eq.s32.totalorder %s36, 0
      %p397 = por %p395, %p396
      %s398 = ssub.s32 %s30, %s37
      %p399 = scmp.eq.s32.totalorder %s398, 0
      %s401 = sadd.s32 %s400, 1
      %s402 = scalar_select %p399, %s400, %s401
      %p405 = pneg %p399
      %p406 = scmp.eq.s32.totalorder %s30, 1
      %p407 = por %p405, %p406
      %p408 = scmp.ne.s32.totalorder %s400, %s403
      %p409 = scmp.eq.s32.totalorder %s30, 0
      %p410 = por %p408, %p409
      %p411 = scmp.ne.s32.totalorder %s400, %s403
      %p412 = scmp.eq.s32.totalorder %s35, 1
      %p413 = por %p411, %p412
      %p414 = scmp.ne.s32.totalorder %s403, %s404
      %p415 = scmp.eq.s32.totalorder %s35, 0
      %p416 = por %p414, %p415
      %p417 = scmp.ne.s32.totalorder %s403, %s404
      %p418 = scmp.eq.s32.totalorder %s36, 1
      %p419 = por %p417, %p418
      %p421 = scmp.ne.s32.totalorder %s404, %s420
      %p422 = scmp.eq.s32.totalorder %s36, 0
      %p423 = por %p421, %p422
      %s424 = ssub.s32 %s30, %s37
      %p425 = scmp.eq.s32.totalorder %s424, 0
      %s427 = sadd.s32 %s426, 1
      %s428 = scalar_select %p425, %s426, %s427
      %p431 = pneg %p425
      %p432 = scmp.eq.s32.totalorder %s30, 1
      %p433 = por %p431, %p432
      %p434 = scmp.ne.s32.totalorder %s426, %s429
      %p435 = scmp.eq.s32.totalorder %s30, 0
      %p436 = por %p434, %p435
      %p437 = scmp.ne.s32.totalorder %s426, %s429
      %p438 = scmp.eq.s32.totalorder %s35, 1
      %p439 = por %p437, %p438
      %p440 = scmp.ne.s32.totalorder %s429, %s430
      %p441 = scmp.eq.s32.totalorder %s35, 0
      %p442 = por %p440, %p441
      %p443 = scmp.ne.s32.totalorder %s429, %s430
      %p444 = scmp.eq.s32.totalorder %s36, 1
      %p445 = por %p443, %p444
      %p447 = scmp.ne.s32.totalorder %s430, %s446
      %p448 = scmp.eq.s32.totalorder %s36, 0
      %p449 = por %p447, %p448
      %s450 = ssub.s32 %s30, %s37
      %p451 = scmp.eq.s32.totalorder %s450, 0
      %s453 = sadd.s32 %s452, 1
      %s454 = scalar_select %p451, %s452, %s453
      %p457 = pneg %p451
      %p458 = scmp.eq.s32.totalorder %s30, 1
      %p459 = por %p457, %p458
      %p460 = scmp.ne.s32.totalorder %s452, %s455
      %p461 = scmp.eq.s32.totalorder %s30, 0
      %p462 = por %p460, %p461
      %p463 = scmp.ne.s32.totalorder %s452, %s455
      %p464 = scmp.eq.s32.totalorder %s35, 1
      %p465 = por %p463, %p464
      %p466 = scmp.ne.s32.totalorder %s455, %s456
      %p467 = scmp.eq.s32.totalorder %s35, 0
      %p468 = por %p466, %p467
      %p469 = scmp.ne.s32.totalorder %s455, %s456
      %p470 = scmp.eq.s32.totalorder %s36, 1
      %p471 = por %p469, %p470
      %p473 = scmp.ne.s32.totalorder %s456, %s472
      %p474 = scmp.eq.s32.totalorder %s36, 0
      %p475 = por %p473, %p474
      %s477 = sadd.s32 %s476, 1
      %p480 = scmp.eq.s32.totalorder %s30, 1
      %p481 = scmp.ne.s32.totalorder %s476, %s478
      %p482 = scmp.eq.s32.totalorder %s30, 0
      %p483 = por %p481, %p482
      %p484 = scmp.ne.s32.totalorder %s476, %s478
      %p485 = scmp.eq.s32.totalorder %s35, 1
      %p486 = por %p484, %p485
      %p487 = scmp.ne.s32.totalorder %s478, %s479
      %p488 = scmp.eq.s32.totalorder %s35, 0
      %p489 = por %p487, %p488
      %p490 = scmp.ne.s32.totalorder %s478, %s479
      %p491 = scmp.eq.s32.totalorder %s36, 1
      %p492 = por %p490, %p491
      %p494 = scmp.ne.s32.totalorder %s479, %s493
      %p495 = scmp.eq.s32.totalorder %s36, 0
      %p496 = por %p494, %p495
      %s498 = sadd.s32 %s497, 1
      %p501 = scmp.eq.s32.totalorder %s30, 1
      %p502 = scmp.ne.s32.totalorder %s497, %s499
      %p503 = scmp.eq.s32.totalorder %s30, 0
      %p504 = por %p502, %p503
      %p505 = scmp.ne.s32.totalorder %s497, %s499
      %p506 = scmp.eq.s32.totalorder %s35, 1
      %p507 = por %p505, %p506
      %p508 = scmp.ne.s32.totalorder %s499, %s500
      %p509 = scmp.eq.s32.totalorder %s35, 0
      %p510 = por %p508, %p509
      %p511 = scmp.ne.s32.totalorder %s499, %s500
      %p512 = scmp.eq.s32.totalorder %s36, 1
      %p513 = por %p511, %p512
      %p515 = scmp.ne.s32.totalorder %s500, %s514
      %p516 = scmp.eq.s32.totalorder %s36, 0
      %p517 = por %p515, %p516
      %s519 = sadd.s32 %s518, 1
      %p522 = scmp.eq.s32.totalorder %s30, 1
      %p523 = scmp.ne.s32.totalorder %s518, %s520
      %p524 = scmp.eq.s32.totalorder %s30, 0
      %p525 = por %p523, %p524
      %p526 = scmp.ne.s32.totalorder %s518, %s520
      %p527 = scmp.eq.s32.totalorder %s35, 1
      %p528 = por %p526, %p527
      %p529 = scmp.ne.s32.totalorder %s520, %s521
      %p530 = scmp.eq.s32.totalorder %s35, 0
      %p531 = por %p529, %p530
      %p532 = scmp.ne.s32.totalorder %s520, %s521
      %p533 = scmp.eq.s32.totalorder %s36, 1
      %p534 = por %p532, %p533
      %p536 = scmp.ne.s32.totalorder %s521, %s535
      %p537 = scmp.eq.s32.totalorder %s36, 0
      %p538 = por %p536, %p537
      %p539 = scmp.le.s32.totalorder 1, %s30
      %p540 = scmp.lt.s32.totalorder %s30, 3
      %p541 = pnand %p539, %p540
      %p542 = pneg %p541
      // Predicated region
      $region9: #{tpu_custom_call.1} parent=5 // pred_check
        _
      $region10: #{tpu_custom_call.1} parent=5 // pred_check_branch
        %544 = sbr.rel (%p541) target = $region12
      $region11: #{tpu_custom_call.1} parent=5 // pred_region
        %s545 = ssub.s32 %s30, 1
        // Predicated region
        $region13: #{tpu_custom_call.1} parent=11 // pred_check
          %p546 = pneg %p51
        $region14: #{tpu_custom_call.1} parent=11 // pred_check_branch
          %548 = sbr.rel (%p546) target = $region16
        $region15: #{tpu_custom_call.1} parent=11 // pred_region
          %550 = vsyncadd [#allocation6], 0
          %s551 = sshll.u32 %s0, 4
          %s552 = int_to_ptr.hbm [resolvable:$true] %s551
          %s553 = sshll.u32 [#allocation5], 4
          %s554 = int_to_ptr.vmem [resolvable:$true] %s553
          %559 = dma.hbm_to_vmem [thread:$0]  %s552, 256, %s554, [#allocation6], 128, 128, 8
        $region16: #{tpu_custom_call.1} parent=11 // pred_fallthru
          _
        // Predicated region
        $region17: #{tpu_custom_call.1} parent=11 // pred_check
          %p560 = pneg %p72
        $region18: #{tpu_custom_call.1} parent=11 // pred_check_branch
          %562 = sbr.rel (%p560) target = $region20
        $region19: #{tpu_custom_call.1} parent=11 // pred_region
          _
        $region20: #{tpu_custom_call.1} parent=11 // pred_fallthru
          _
        // Predicated region
        $region21: #{tpu_custom_call.1} parent=11 // pred_check
          %p563 = pneg %p93
        $region22: #{tpu_custom_call.1} parent=11 // pred_check_branch
          %565 = sbr.rel (%p563) target = $region24
        $region23: #{tpu_custom_call.1} parent=11 // pred_region
          %567 = vsyncadd [#allocation9], 0
          %s569 = sshll.u32 %s2, 4
          %s570 = int_to_ptr.hbm [resolvable:$true] %s569
          %s571 = sshll.u32 [#allocation8], 4
          %s572 = int_to_ptr.vmem [resolvable:$true] %s571
          %574 = dma.hbm_to_vmem [thread:$0]  %s570, 16, %s572, [#allocation9]
        $region24: #{tpu_custom_call.1} parent=11 // pred_fallthru
          _
        // Predicated region
        $region25: #{tpu_custom_call.1} parent=11 // pred_check
          %p575 = pneg %p114
        $region26: #{tpu_custom_call.1} parent=11 // pred_check_branch
          %577 = sbr.rel (%p575) target = $region28
        $region27: #{tpu_custom_call.1} parent=11 // pred_region
          _
        $region28: #{tpu_custom_call.1} parent=11 // pred_fallthru
          _
        // Predicated region
        $region29: #{tpu_custom_call.1} parent=11 // pred_check
          %p578 = pneg %p135
        $region30: #{tpu_custom_call.1} parent=11 // pred_check_branch
          %580 = sbr.rel (%p578) target = $region32
        $region31: #{tpu_custom_call.1} parent=11 // pred_region
          %582 = vsyncadd [#allocation9], 0
          %s584 = sshll.u32 %s4, 4
          %s585 = int_to_ptr.hbm [resolvable:$true] %s584
          %s586 = sshll.u32 [#allocation10], 4
          %s587 = int_to_ptr.vmem [resolvable:$true] %s586
          %589 = dma.hbm_to_vmem [thread:$0]  %s585, 16, %s587, [#allocation9]
        $region32: #{tpu_custom_call.1} parent=11 // pred_fallthru
          _
        // Predicated region
        $region33: #{tpu_custom_call.1} parent=11 // pred_check
          %p590 = pneg %p156
        $region34: #{tpu_custom_call.1} parent=11 // pred_check_branch
          %592 = sbr.rel (%p590) target = $region36
        $region35: #{tpu_custom_call.1} parent=11 // pred_region
          %594 = vsyncadd [#allocation12], 0
          %s596 = sshll.u32 %s5, 4
          %s597 = int_to_ptr.hbm [resolvable:$true] %s596
          %s598 = sshll.u32 [#allocation11], 4
          %s599 = int_to_ptr.vmem [resolvable:$true] %s598
          %601 = dma.hbm_to_vmem [thread:$0]  %s597, 16, %s599, [#allocation12]
        $region36: #{tpu_custom_call.1} parent=11 // pred_fallthru
          _
        // Predicated region
        $region37: #{tpu_custom_call.1} parent=11 // pred_check
          %p602 = pneg %p489
        $region38: #{tpu_custom_call.1} parent=11 // pred_check_branch
          %604 = sbr.rel (%p602) target = $region40
        $region39: #{tpu_custom_call.1} parent=11 // pred_region
          _
        $region40: #{tpu_custom_call.1} parent=11 // pred_fallthru
          _
        // Predicated region
        $region41: #{tpu_custom_call.1} parent=11 // pred_check
          %p605 = pneg %p510
        $region42: #{tpu_custom_call.1} parent=11 // pred_check_branch
          %607 = sbr.rel (%p605) target = $region44
        $region43: #{tpu_custom_call.1} parent=11 // pred_region
          %609 = vsyncadd [#allocation9], 0
          %s611 = sshll.u32 %s19, 4
          %s612 = int_to_ptr.hbm [resolvable:$true] %s611
          %s613 = sshll.u32 [#allocation21], 4
          %s614 = int_to_ptr.vmem [resolvable:$true] %s613
          %616 = dma.hbm_to_vmem [thread:$0]  %s612, 16, %s614, [#allocation9]
        $region44: #{tpu_custom_call.1} parent=11 // pred_fallthru
          _
      $region12: #{tpu_custom_call.1} parent=5 // pred_fallthru
        _
      %p617 = scmp.lt.s32.totalorder %s30, 2
      // Predicated region
      $region45: #{tpu_custom_call.1} parent=5 // pred_check
        %p618 = pneg %p617
      $region46: #{tpu_custom_call.1} parent=5 // pred_check_branch
        %620 = sbr.rel (%p618) target = $region48
      $region47: #{tpu_custom_call.1} parent=5 // pred_region
        // Predicated region
        $region49: #{tpu_custom_call.1} parent=47 // pred_check
          %p621 = pneg %p176
        $region50: #{tpu_custom_call.1} parent=47 // pred_check_branch
          %623 = sbr.rel (%p621) target = $region52
        $region51: #{tpu_custom_call.1} parent=47 // pred_region
          %p624 = scmp.lt.s32.totalorder %s30, 1
          %s625 = scalar_select %p624, %s30, 1
          %s626 = smul.addr %s625, 4
          %s627 = smul.addr %s626, 8
          %s628 = scalar_lea.vmem %s6, %s627
        $region52: #{tpu_custom_call.1} parent=47 // pred_fallthru
          _
        // Predicated region
        $region53: #{tpu_custom_call.1} parent=47 // pred_check
          %p629 = pneg %p202
        $region54: #{tpu_custom_call.1} parent=47 // pred_check_branch
          %631 = sbr.rel (%p629) target = $region56
        $region55: #{tpu_custom_call.1} parent=47 // pred_region
          %s632 = sand.u32 %s30, 1
          %s633 = scalar_lea.sflag [#allocation6], %s632
          %s634 = sand.u32 %s192, 1
          %s635 = scalar_lea.vmem [#allocation13], %s634
          %637 = vsyncadd %s633, 0
          %s638 = scalar_lea.hbm %s7, %s30
          %s640 = sshll.u32 %s638, 4
          %s641 = int_to_ptr.hbm [resolvable:$true] %s640
          %s642 = sshll.u32 %s635, 4
          %s643 = int_to_ptr.vmem [resolvable:$true] %s642
          %645 = dma.hbm_to_vmem [thread:$0]  %s641, 16, %s643, %s633
        $region56: #{tpu_custom_call.1} parent=47 // pred_fallthru
          _
        // Predicated region
        $region57: #{tpu_custom_call.1} parent=47 // pred_check
          %p646 = pneg %p228
        $region58: #{tpu_custom_call.1} parent=47 // pred_check_branch
          %648 = sbr.rel (%p646) target = $region60
        $region59: #{tpu_custom_call.1} parent=47 // pred_region
          %p649 = scmp.lt.s32.totalorder %s30, 1
          %s650 = scalar_select %p649, %s30, 1
          %s651 = smul.addr %s650, 4
          %s652 = smul.addr %s651, 8
          %s653 = scalar_lea.vmem %s8, %s652
        $region60: #{tpu_custom_call.1} parent=47 // pred_fallthru
          _
        // Predicated region
        $region61: #{tpu_custom_call.1} parent=47 // pred_check
          %p654 = pneg %p254
        $region62: #{tpu_custom_call.1} parent=47 // pred_check_branch
          %656 = sbr.rel (%p654) target = $region64
        $region63: #{tpu_custom_call.1} parent=47 // pred_region
          %s657 = sand.u32 %s30, 1
          %s658 = scalar_lea.sflag [#allocation6], %s657
          %s659 = sand.u32 %s244, 1
          %s660 = scalar_lea.vmem [#allocation14], %s659
          %662 = vsyncadd %s658, 0
          %s663 = scalar_lea.hbm %s9, %s30
          %s665 = sshll.u32 %s663, 4
          %s666 = int_to_ptr.hbm [resolvable:$true] %s665
          %s667 = sshll.u32 %s660, 4
          %s668 = int_to_ptr.vmem [resolvable:$true] %s667
          %670 = dma.hbm_to_vmem [thread:$0]  %s666, 16, %s668, %s658
        $region64: #{tpu_custom_call.1} parent=47 // pred_fallthru
          _
        // Predicated region
        $region65: #{tpu_custom_call.1} parent=47 // pred_check
          %p671 = pneg %p280
        $region66: #{tpu_custom_call.1} parent=47 // pred_check_branch
          %673 = sbr.rel (%p671) target = $region68
        $region67: #{tpu_custom_call.1} parent=47 // pred_region
          %s674 = sand.u32 %s30, 1
          %s675 = scalar_lea.sflag [#allocation6], %s674
          %s676 = sand.u32 %s270, 1
          %s677 = scalar_lea.vmem [#allocation15], %s676
          %679 = vsyncadd %s675, 0
          %s680 = scalar_lea.hbm %s10, %s30
          %s682 = sshll.u32 %s680, 4
          %s683 = int_to_ptr.hbm [resolvable:$true] %s682
          %s684 = sshll.u32 %s677, 4
          %s685 = int_to_ptr.vmem [resolvable:$true] %s684
          %687 = dma.hbm_to_vmem [thread:$0]  %s683, 16, %s685, %s675
        $region68: #{tpu_custom_call.1} parent=47 // pred_fallthru
          _
        // Predicated region
        $region69: #{tpu_custom_call.1} parent=47 // pred_check
          %p688 = pneg %p306
        $region70: #{tpu_custom_call.1} parent=47 // pred_check_branch
          %690 = sbr.rel (%p688) target = $region72
        $region71: #{tpu_custom_call.1} parent=47 // pred_region
          %s691 = sand.u32 %s30, 1
          %s692 = scalar_lea.sflag [#allocation6], %s691
          %s693 = sand.u32 %s296, 1
          %s694 = scalar_lea.vmem [#allocation16], %s693
          %696 = vsyncadd %s692, 0
          %s697 = scalar_lea.hbm %s11, %s30
          %s699 = sshll.u32 %s697, 4
          %s700 = int_to_ptr.hbm [resolvable:$true] %s699
          %s701 = sshll.u32 %s694, 4
          %s702 = int_to_ptr.vmem [resolvable:$true] %s701
          %704 = dma.hbm_to_vmem [thread:$0]  %s700, 16, %s702, %s692
        $region72: #{tpu_custom_call.1} parent=47 // pred_fallthru
          _
        // Predicated region
        $region73: #{tpu_custom_call.1} parent=47 // pred_check
          %p705 = pneg %p332
        $region74: #{tpu_custom_call.1} parent=47 // pred_check_branch
          %707 = sbr.rel (%p705) target = $region76
        $region75: #{tpu_custom_call.1} parent=47 // pred_region
          %p708 = scmp.lt.s32.totalorder %s30, 1
          %s709 = scalar_select %p708, %s30, 1
          %s710 = smul.addr %s709, 4
          %s711 = smul.addr %s710, 8
          %s712 = scalar_lea.vmem %s12, %s711
        $region76: #{tpu_custom_call.1} parent=47 // pred_fallthru
          _
        // Predicated region
        $region77: #{tpu_custom_call.1} parent=47 // pred_check
          %p713 = pneg %p358
        $region78: #{tpu_custom_call.1} parent=47 // pred_check_branch
          %715 = sbr.rel (%p713) target = $region80
        $region79: #{tpu_custom_call.1} parent=47 // pred_region
          %s716 = sand.u32 %s30, 1
          %s717 = scalar_lea.sflag [#allocation6], %s716
          %s718 = sand.u32 %s348, 1
          %s719 = scalar_lea.vmem [#allocation17], %s718
          %721 = vsyncadd %s717, 0
          %s722 = scalar_lea.hbm %s13, %s30
          %s724 = sshll.u32 %s722, 4
          %s725 = int_to_ptr.hbm [resolvable:$true] %s724
          %s726 = sshll.u32 %s719, 4
          %s727 = int_to_ptr.vmem [resolvable:$true] %s726
          %729 = dma.hbm_to_vmem [thread:$0]  %s725, 16, %s727, %s717
        $region80: #{tpu_custom_call.1} parent=47 // pred_fallthru
          _
        // Predicated region
        $region81: #{tpu_custom_call.1} parent=47 // pred_check
          %p730 = pneg %p384
        $region82: #{tpu_custom_call.1} parent=47 // pred_check_branch
          %732 = sbr.rel (%p730) target = $region84
        $region83: #{tpu_custom_call.1} parent=47 // pred_region
          %p733 = scmp.lt.s32.totalorder %s30, 1
          %s734 = scalar_select %p733, %s30, 1
          %s735 = smul.addr %s734, 8
          %s736 = smul.addr %s735, 8
          %s737 = scalar_lea.vmem %s14, %s736
        $region84: #{tpu_custom_call.1} parent=47 // pred_fallthru
          _
        // Predicated region
        $region85: #{tpu_custom_call.1} parent=47 // pred_check
          %p738 = pneg %p410
        $region86: #{tpu_custom_call.1} parent=47 // pred_check_branch
          %740 = sbr.rel (%p738) target = $region88
        $region87: #{tpu_custom_call.1} parent=47 // pred_region
          %s741 = sand.u32 %s30, 1
          %s742 = scalar_lea.sflag [#allocation6], %s741
          %s743 = sand.u32 %s400, 1
          %s744 = scalar_lea.vmem [#allocation18], %s743
          %746 = vsyncadd %s742, 0
          %s747 = scalar_lea.hbm %s15, %s30
          %s749 = sshll.u32 %s747, 4
          %s750 = int_to_ptr.hbm [resolvable:$true] %s749
          %s751 = sshll.u32 %s744, 4
          %s752 = int_to_ptr.vmem [resolvable:$true] %s751
          %754 = dma.hbm_to_vmem [thread:$0]  %s750, 16, %s752, %s742
        $region88: #{tpu_custom_call.1} parent=47 // pred_fallthru
          _
        // Predicated region
        $region89: #{tpu_custom_call.1} parent=47 // pred_check
          %p755 = pneg %p436
        $region90: #{tpu_custom_call.1} parent=47 // pred_check_branch
          %757 = sbr.rel (%p755) target = $region92
        $region91: #{tpu_custom_call.1} parent=47 // pred_region
          %s758 = sand.u32 %s30, 1
          %s759 = scalar_lea.sflag [#allocation6], %s758
          %s760 = sand.u32 %s426, 1
          %s761 = scalar_lea.vmem [#allocation19], %s760
          %763 = vsyncadd %s759, 0
          %s764 = scalar_lea.hbm %s16, %s30
          %s766 = sshll.u32 %s764, 4
          %s767 = int_to_ptr.hbm [resolvable:$true] %s766
          %s768 = sshll.u32 %s761, 4
          %s769 = int_to_ptr.vmem [resolvable:$true] %s768
          %771 = dma.hbm_to_vmem [thread:$0]  %s767, 16, %s769, %s759
        $region92: #{tpu_custom_call.1} parent=47 // pred_fallthru
          _
        // Predicated region
        $region93: #{tpu_custom_call.1} parent=47 // pred_check
          %p772 = pneg %p462
        $region94: #{tpu_custom_call.1} parent=47 // pred_check_branch
          %774 = sbr.rel (%p772) target = $region96
        $region95: #{tpu_custom_call.1} parent=47 // pred_region
          %s775 = sand.u32 %s30, 1
          %s776 = scalar_lea.sflag [#allocation6], %s775
          %s777 = sand.u32 %s452, 1
          %s778 = scalar_lea.vmem [#allocation20], %s777
          %780 = vsyncadd %s776, 0
          %s781 = scalar_lea.hbm %s17, %s30
          %s783 = sshll.u32 %s781, 4
          %s784 = int_to_ptr.hbm [resolvable:$true] %s783
          %s785 = sshll.u32 %s778, 4
          %s786 = int_to_ptr.vmem [resolvable:$true] %s785
          %788 = dma.hbm_to_vmem [thread:$0]  %s784, 16, %s786, %s776
        $region96: #{tpu_custom_call.1} parent=47 // pred_fallthru
          _
      $region48: #{tpu_custom_call.1} parent=5 // pred_fallthru
        _
      %p789 = scmp.le.s32.totalorder 1, %s30
      %p790 = scmp.lt.s32.totalorder %s30, 3
      %p791 = pnand %p789, %p790
      %p792 = pneg %p791
      // Predicated region
      $region97: #{tpu_custom_call.1} parent=5 // pred_check
        _
      $region98: #{tpu_custom_call.1} parent=5 // pred_check_branch
        %794 = sbr.rel (%p791) target = $region100
      $region99: #{tpu_custom_call.1} parent=5 // pred_region
        %s795 = ssub.s32 %s30, 1
        // Predicated region
        $region101: #{tpu_custom_call.1} parent=99 // pred_check
          %p796 = pneg %p51
        $region102: #{tpu_custom_call.1} parent=99 // pred_check_branch
          %798 = sbr.rel (%p796) target = $region104
        $region103: #{tpu_custom_call.1} parent=99 // pred_region
          %800 = dma.done [#allocation6], 256
        $region104: #{tpu_custom_call.1} parent=99 // pred_fallthru
          _
        // Predicated region
        $region105: #{tpu_custom_call.1} parent=99 // pred_check
          %p801 = pneg %p93
        $region106: #{tpu_custom_call.1} parent=99 // pred_check_branch
          %803 = sbr.rel (%p801) target = $region108
        $region107: #{tpu_custom_call.1} parent=99 // pred_region
          %805 = dma.done [#allocation9], 16
        $region108: #{tpu_custom_call.1} parent=99 // pred_fallthru
          _
        // Predicated region
        $region109: #{tpu_custom_call.1} parent=99 // pred_check
          %p806 = pneg %p135
        $region110: #{tpu_custom_call.1} parent=99 // pred_check_branch
          %808 = sbr.rel (%p806) target = $region112
        $region111: #{tpu_custom_call.1} parent=99 // pred_region
          %810 = dma.done [#allocation9], 16
        $region112: #{tpu_custom_call.1} parent=99 // pred_fallthru
          _
        // Predicated region
        $region113: #{tpu_custom_call.1} parent=99 // pred_check
          %p811 = pneg %p156
        $region114: #{tpu_custom_call.1} parent=99 // pred_check_branch
          %813 = sbr.rel (%p811) target = $region116
        $region115: #{tpu_custom_call.1} parent=99 // pred_region
          %815 = dma.done [#allocation12], 16
        $region116: #{tpu_custom_call.1} parent=99 // pred_fallthru
          _
        %s816 = sand.u32 %s35, 1
        %s817 = scalar_lea.sflag [#allocation6], %s816
        %s818 = sand.u32 %s195, 1
        %s819 = scalar_lea.vmem [#allocation13], %s818
        // Predicated region
        $region117: #{tpu_custom_call.1} parent=99 // pred_check
          %p820 = pneg %p208
        $region118: #{tpu_custom_call.1} parent=99 // pred_check_branch
          %822 = sbr.rel (%p820) target = $region120
        $region119: #{tpu_custom_call.1} parent=99 // pred_region
          %824 = dma.done %s817, 16
        $region120: #{tpu_custom_call.1} parent=99 // pred_fallthru
          _
        %s825 = sand.u32 %s35, 1
        %s826 = scalar_lea.sflag [#allocation6], %s825
        %s827 = sand.u32 %s247, 1
        %s828 = scalar_lea.vmem [#allocation14], %s827
        // Predicated region
        $region121: #{tpu_custom_call.1} parent=99 // pred_check
          %p829 = pneg %p260
        $region122: #{tpu_custom_call.1} parent=99 // pred_check_branch
          %831 = sbr.rel (%p829) target = $region124
        $region123: #{tpu_custom_call.1} parent=99 // pred_region
          %833 = dma.done %s826, 16
        $region124: #{tpu_custom_call.1} parent=99 // pred_fallthru
          _
        %s834 = sand.u32 %s35, 1
        %s835 = scalar_lea.sflag [#allocation6], %s834
        %s836 = sand.u32 %s273, 1
        %s837 = scalar_lea.vmem [#allocation15], %s836
        // Predicated region
        $region125: #{tpu_custom_call.1} parent=99 // pred_check
          %p838 = pneg %p286
        $region126: #{tpu_custom_call.1} parent=99 // pred_check_branch
          %840 = sbr.rel (%p838) target = $region128
        $region127: #{tpu_custom_call.1} parent=99 // pred_region
          %842 = dma.done %s835, 16
        $region128: #{tpu_custom_call.1} parent=99 // pred_fallthru
          _
        %s843 = sand.u32 %s35, 1
        %s844 = scalar_lea.sflag [#allocation6], %s843
        %s845 = sand.u32 %s299, 1
        %s846 = scalar_lea.vmem [#allocation16], %s845
        // Predicated region
        $region129: #{tpu_custom_call.1} parent=99 // pred_check
          %p847 = pneg %p312
        $region130: #{tpu_custom_call.1} parent=99 // pred_check_branch
          %849 = sbr.rel (%p847) target = $region132
        $region131: #{tpu_custom_call.1} parent=99 // pred_region
          %851 = dma.done %s844, 16
        $region132: #{tpu_custom_call.1} parent=99 // pred_fallthru
          _
        %s852 = sand.u32 %s35, 1
        %s853 = scalar_lea.sflag [#allocation6], %s852
        %s854 = sand.u32 %s351, 1
        %s855 = scalar_lea.vmem [#allocation17], %s854
        // Predicated region
        $region133: #{tpu_custom_call.1} parent=99 // pred_check
          %p856 = pneg %p364
        $region134: #{tpu_custom_call.1} parent=99 // pred_check_branch
          %858 = sbr.rel (%p856) target = $region136
        $region135: #{tpu_custom_call.1} parent=99 // pred_region
          %860 = dma.done %s853, 16
        $region136: #{tpu_custom_call.1} parent=99 // pred_fallthru
          _
        %s861 = sand.u32 %s35, 1
        %s862 = scalar_lea.sflag [#allocation6], %s861
        %s863 = sand.u32 %s403, 1
        %s864 = scalar_lea.vmem [#allocation18], %s863
        // Predicated region
        $region137: #{tpu_custom_call.1} parent=99 // pred_check
          %p865 = pneg %p416
        $region138: #{tpu_custom_call.1} parent=99 // pred_check_branch
          %867 = sbr.rel (%p865) target = $region140
        $region139: #{tpu_custom_call.1} parent=99 // pred_region
          %869 = dma.done %s862, 16
        $region140: #{tpu_custom_call.1} parent=99 // pred_fallthru
          _
        %s870 = sand.u32 %s35, 1
        %s871 = scalar_lea.sflag [#allocation6], %s870
        %s872 = sand.u32 %s429, 1
        %s873 = scalar_lea.vmem [#allocation19], %s872
        // Predicated region
        $region141: #{tpu_custom_call.1} parent=99 // pred_check
          %p874 = pneg %p442
        $region142: #{tpu_custom_call.1} parent=99 // pred_check_branch
          %876 = sbr.rel (%p874) target = $region144
        $region143: #{tpu_custom_call.1} parent=99 // pred_region
          %878 = dma.done %s871, 16
        $region144: #{tpu_custom_call.1} parent=99 // pred_fallthru
          _
        %s879 = sand.u32 %s35, 1
        %s880 = scalar_lea.sflag [#allocation6], %s879
        %s881 = sand.u32 %s455, 1
        %s882 = scalar_lea.vmem [#allocation20], %s881
        // Predicated region
        $region145: #{tpu_custom_call.1} parent=99 // pred_check
          %p883 = pneg %p468
        $region146: #{tpu_custom_call.1} parent=99 // pred_check_branch
          %885 = sbr.rel (%p883) target = $region148
        $region147: #{tpu_custom_call.1} parent=99 // pred_region
          %887 = dma.done %s880, 16
        $region148: #{tpu_custom_call.1} parent=99 // pred_fallthru
          _
        // Predicated region
        $region149: #{tpu_custom_call.1} parent=99 // pred_check
          %p888 = pneg %p510
        $region150: #{tpu_custom_call.1} parent=99 // pred_check_branch
          %890 = sbr.rel (%p888) target = $region152
        $region151: #{tpu_custom_call.1} parent=99 // pred_region
          %892 = dma.done [#allocation9], 16
        $region152: #{tpu_custom_call.1} parent=99 // pred_fallthru
          _
        %p893 = pneg %p51
        %p894 = pneg %p48
        %p895 = pneg %p72
        %p896 = pneg %p69
        %p897 = pneg %p93
        %p898 = pneg %p90
        %p899 = pneg %p114
        %p900 = pneg %p111
        %p901 = pneg %p135
        %p902 = pneg %p132
        %p903 = pneg %p156
        %p904 = pneg %p153
        %p905 = scmp.lt.s32.totalorder %s35, 1
        %s906 = scalar_select %p905, %s35, 1
        %s907 = smul.addr %s906, 4
        %s908 = smul.addr %s907, 8
        %s909 = scalar_lea.vmem %s6, %s908
        %p910 = pneg %p182
        %p911 = pneg %p179
        %s912 = sand.u32 %s35, 1
        %s913 = scalar_lea.sflag [#allocation6], %s912
        %s914 = sand.u32 %s195, 1
        %s915 = scalar_lea.vmem [#allocation13], %s914
        %p916 = pneg %p208
        %p917 = pneg %p205
        %p918 = scmp.lt.s32.totalorder %s35, 1
        %s919 = scalar_select %p918, %s35, 1
        %s920 = smul.addr %s919, 4
        %s921 = smul.addr %s920, 8
        %s922 = scalar_lea.vmem %s8, %s921
        %p923 = pneg %p234
        %p924 = pneg %p231
        %s925 = sand.u32 %s35, 1
        %s926 = scalar_lea.sflag [#allocation6], %s925
        %s927 = sand.u32 %s247, 1
        %s928 = scalar_lea.vmem [#allocation14], %s927
        %p929 = pneg %p260
        %p930 = pneg %p257
        %s931 = sand.u32 %s35, 1
        %s932 = scalar_lea.sflag [#allocation6], %s931
        %s933 = sand.u32 %s273, 1
        %s934 = scalar_lea.vmem [#allocation15], %s933
        %p935 = pneg %p286
        %p936 = pneg %p283
        %s937 = sand.u32 %s35, 1
        %s938 = scalar_lea.sflag [#allocation6], %s937
        %s939 = sand.u32 %s299, 1
        %s940 = scalar_lea.vmem [#allocation16], %s939
        %p941 = pneg %p312
        %p942 = pneg %p309
        %p943 = scmp.lt.s32.totalorder %s35, 1
        %s944 = scalar_select %p943, %s35, 1
        %s945 = smul.addr %s944, 4
        %s946 = smul.addr %s945, 8
        %s947 = scalar_lea.vmem %s12, %s946
        %p948 = pneg %p338
        %p949 = pneg %p335
        %s950 = sand.u32 %s35, 1
        %s951 = scalar_lea.sflag [#allocation6], %s950
        %s952 = sand.u32 %s351, 1
        %s953 = scalar_lea.vmem [#allocation17], %s952
        %p954 = pneg %p364
        %p955 = pneg %p361
        %p956 = scmp.lt.s32.totalorder %s35, 1
        %s957 = scalar_select %p956, %s35, 1
        %s958 = smul.addr %s957, 8
        %s959 = smul.addr %s958, 8
        %s960 = scalar_lea.vmem %s14, %s959
        %p961 = pneg %p390
        %p962 = pneg %p387
        %s963 = sand.u32 %s35, 1
        %s964 = scalar_lea.sflag [#allocation6], %s963
        %s965 = sand.u32 %s403, 1
        %s966 = scalar_lea.vmem [#allocation18], %s965
        %p967 = pneg %p416
        %p968 = pneg %p413
        %s969 = sand.u32 %s35, 1
        %s970 = scalar_lea.sflag [#allocation6], %s969
        %s971 = sand.u32 %s429, 1
        %s972 = scalar_lea.vmem [#allocation19], %s971
        %p973 = pneg %p442
        %p974 = pneg %p439
        %s975 = sand.u32 %s35, 1
        %s976 = scalar_lea.sflag [#allocation6], %s975
        %s977 = sand.u32 %s455, 1
        %s978 = scalar_lea.vmem [#allocation20], %s977
        %p979 = pneg %p468
        %p980 = pneg %p465
        %p981 = pneg %p489
        %p982 = pneg %p486
        %p983 = pneg %p510
        %p984 = pneg %p507
        %p985 = pneg %p531
        %p986 = pneg %p528
        %p987 = scmp.lt.s32.totalorder %s35, 1
        %s988 = scalar_select %p987, %s35, 1
        %s989 = smul.addr %s988, 4
        %s990 = smul.addr %s989, 8
        %s991 = scalar_lea.vmem %s6, %s990
        %p992 = scmp.lt.s32.totalorder %s35, 1
        %s993 = scalar_select %p992, %s35, 1
        %s994 = smul.addr %s993, 4
        %s995 = smul.addr %s994, 8
        %s996 = scalar_lea.vmem %s8, %s995
        %p997 = scmp.lt.s32.totalorder %s35, 1
        %s998 = scalar_select %p997, %s35, 1
        %s999 = smul.addr %s998, 4
        %s1000 = smul.addr %s999, 8
        %s1001 = scalar_lea.vmem %s12, %s1000
        %p1002 = scmp.lt.s32.totalorder %s35, 1
        %s1003 = scalar_select %p1002, %s35, 1
        %s1004 = smul.addr %s1003, 8
        %s1005 = smul.addr %s1004, 8
        %s1006 = scalar_lea.vmem %s14, %s1005
        %p1007 = scmp.eq.s32.totalorder %s35, 0
        // Predicated region
        $region153: #{tpu_custom_call.1} parent=99 // pred_check
          %p1008 = pneg %p1007
        $region154: #{tpu_custom_call.1} parent=99 // pred_check_branch
          %1010 = sbr.rel (%p1008) target = $region156
        $region155: #{tpu_custom_call.1} parent=99 // pred_region
          %v1011 = vld [vmem:[#allocation5] sm:$0xff]
          %v1012 = vld [vmem:[#allocation5 + $0x8] sm:$0xff]
          %v1013 = vld [vmem:[#allocation10] sm:$0x1]
          %v1014 = vld [vmem:[#allocation11] sm:$0x1]
          %vm1015 = vcmask 261120
          %v1016 = vsel %vm1015, %v1011, 0.0
          %1017 = vadd.xlane.f32.xlu0 %v1016
          %v1018 = vpop.xlane.xlu0 %1017
          %v1019 = vsel %vm1015, %v1012, 0.0
          %1020 = vadd.xlane.f32.xlu0 %v1019
          %v1021 = vpop.xlane.xlu0 %1020
          %v1022 = vrcp.pop 32.0
          %v1023 = vmul.f32 32.0, %v1022
          %v1024 = vsub.f32 1.0, %v1023
          %v1025 = vmul.f32 %v1022, %v1024
          %v1026 = vadd.f32 %v1022, %v1025
          %vm1027 = vweird.f32 %v1022
          %v1028 = vsel %vm1027, %v1022, %v1026
          %v1029 = vmul.f32 %v1018, %v1028
          %v1030 = vmul.f32 %v1021, %v1028
          %v1031 = vsub.f32 %v1011, %v1029
          %v1032 = vsub.f32 %v1012, %v1030
          %v1033 = vmul.f32 %v1031, %v1031
          %v1034 = vmul.f32 %v1032, %v1032
          %v1035 = vsel %vm1015, %v1033, 0.0
          %1036 = vadd.xlane.f32.xlu0 %v1035
          %v1037 = vpop.xlane.xlu0 %1036
          %v1038 = vsel %vm1015, %v1034, 0.0
          %1039 = vadd.xlane.f32.xlu0 %v1038
          %v1040 = vpop.xlane.xlu0 %1039
          %v1041 = vmul.f32 %v1037, %v1028
          %v1042 = vmul.f32 %v1040, %v1028
          %v1043 = vadd.f32 %v1041, 1e-12
          %v1044 = vadd.f32 %v1042, 1e-12
          %v1045 = vrsqrt.pop %v1043
          %v1046 = vmul.f32 %v1045, %v1043
          %v1047 = vmul.f32 %v1046, %v1045
          %v1048 = vmul.f32 0.5, %v1047
          %v1049 = vsub.f32 1.5, %v1048
          %v1050 = vmul.f32 %v1045, %v1049
          %vm1051 = vweird.f32 %v1043
          %vm1052 = vweird.f32 %v1045
          %vm1053 = vmor %vm1051, %vm1052
          %v1054 = vsel %vm1053, %v1045, %v1050
          %v1055 = vrsqrt.pop %v1044
          %v1056 = vmul.f32 %v1055, %v1044
          %v1057 = vmul.f32 %v1056, %v1055
          %v1058 = vmul.f32 0.5, %v1057
          %v1059 = vsub.f32 1.5, %v1058
          %v1060 = vmul.f32 %v1055, %v1059
          %vm1061 = vweird.f32 %v1044
          %vm1062 = vweird.f32 %v1055
          %vm1063 = vmor %vm1061, %vm1062
          %v1064 = vsel %vm1063, %v1055, %v1060
          %v1065 = vmul.f32 %v1031, %v1054
          %v1066 = vmul.f32 %v1032, %v1064
          %v1068 = vperm.slane %v1013, 0
          %v1070 = vmul.f32 %v1065, %v1068
          %v1071 = vmul.f32 %v1066, %v1068
          %v1073 = vperm.slane %v1014, 0
          %v1075 = vadd.f32 %v1070, %v1073
          %v1076 = vadd.f32 %v1071, %v1073
          %1077 = vst.msk [vmem:[#allocation2] sm:$0xff] %vm1015, %v1075
          %1078 = vst.msk [vmem:[#allocation2 + $0x8] sm:$0xff] %vm1015, %v1076
          %v1079 = vld [vmem:[%s1] sm:$0xff]
          %v1080 = vld [vmem:[%s1 + $0x8] sm:$0xff]
          %v1081 = vld [vmem:[#allocation8] sm:$0x1]
          %1082 = vset.pattern.permute.xlu0 0
          %1083 = vperm.xlu0 %1082, %v1079
          %v1084 = vpop.permute.xlu0 %1083
          %1085 = vset.pattern.permute.xlu0 0
          %1086 = vperm.xlu0 %1085, %v1080
          %v1087 = vpop.permute.xlu0 %1086
          %v1088 = vperm.slane %v1081, 0
          %vm1089 = vcmp.eq.s32.totalorder %v1084, %v1088
          %vm1090 = vcmp.eq.s32.totalorder %v1087, %v1088
          %v1091 = vsel %vm1089, 0.0, -10000.0
          %v1092 = vsel %vm1090, 0.0, -10000.0
          %vm1093 = vcmask 130048
          %1094 = vst.msk [vmem:[#allocation3] sm:$0xff] %vm1093, %v1091
          %1095 = vst.msk [vmem:[#allocation3 + $0x8] sm:$0xff] %vm1093, %v1092
        $region156: #{tpu_custom_call.1} parent=99 // pred_fallthru
          _
        %v1096 = vld [vmem:[#allocation2] sm:$0xff]
        %v1097 = vld [vmem:[#allocation2 + $0x8] sm:$0xff]
        %v1098 = vld [vmem:[#allocation3] sm:$0xff]
        %v1099 = vld [vmem:[#allocation3 + $0x8] sm:$0xff]
        %v1100 = vld [vmem:[%s991] sm:$0xff]
        %v1101 = vld [vmem:[%s991 + $0x8] sm:$0xff]
        %v1102 = vld [vmem:[%s991 + $0x10] sm:$0xff]
        %v1103 = vld [vmem:[%s991 + $0x18] sm:$0xff]
        %v1104 = vld [vmem:[%s819] sm:$0x1]
        %v1106 = vperm.slane %v1104, 0
        %vm1108 = vcmask 261120
        %v1110 = vsel %vm1108, %v1096, 0
        %v1113 = vsel %vm1108, %v1097, 0
        %1115 = vmatpush.msra.mxu0 0.0
        %1116 = vmatpush.msra.mxu0 0.0
        %1117 = vmatpush.msra.mxu0 0.0
        %1118 = vmatpush.msra.mxu0 0.0
        %1119 = vmatpush.msra.mxu0 0.0
        %1120 = vmatpush.msra.mxu0 0.0
        %1121 = vmatpush.msra.mxu0 0.0
        %1122 = vmatpush.msra.mxu0 0.0
        %1123 = vmatpush.msra.mxu0 0.0
        %1124 = vmatpush.msra.mxu0 0.0
        %1125 = vmatpush.msra.mxu0 0.0
        %1126 = vmatpush.msra.mxu0 0.0
        %1127 = vmatpush.msra.mxu0 %v1103
        %1128 = vmatpush.msra.mxu0 %v1102
        %1129 = vmatpush.msra.mxu0 %v1101
        %1130 = vmatpush.msra.mxu0 %v1100
        %1131 = vmatmul.f32.gmra.mxu0 %v1110
        %v1132 = vpop.f32.mrf.mxu0
        %v1133 = vadd.f32 %v1106, %v1132
        %1134 = vmatmul.f32.gmra.mxu0 %v1113
        %v1135 = vpop.f32.mrf.mxu0
        %v1136 = vadd.f32 %v1106, %v1135
        %1137 = vdwg.mxu0
        %1140 = vrot.lane.b32.xlu0 %v1133, 96
        %v1141 = vpop.permute.xlu0 %1140
        %1142 = vrot.lane.b32.xlu0 %v1136, 96
        %v1143 = vpop.permute.xlu0 %1142
        %vm1144 = vcmask 64512
        %v1145 = vsel %vm1144, %v1133, 0
        %v1147 = vsel %vm1144, %v1136, 0
        %v1149 = vsel %vm1144, %v1141, 0
        %v1151 = vsel %vm1144, %v1143, 0
        %1153 = vmatpush.xpose.msra.mxu0 0.0
        %1154 = vmatpush.xpose.msra.mxu0 0.0
        %1155 = vmatpush.xpose.msra.mxu0 0.0
        %1156 = vmatpush.xpose.msra.mxu0 0.0
        %1157 = vmatpush.xpose.msra.mxu0 0.0
        %1158 = vmatpush.xpose.msra.mxu0 0.0
        %1159 = vmatpush.xpose.msra.mxu0 0.0
        %1160 = vmatpush.xpose.msra.mxu0 0.0
        %1161 = vmatpush.xpose.msra.mxu0 0.0
        %1162 = vmatpush.xpose.msra.mxu0 0.0
        %1163 = vmatpush.xpose.msra.mxu0 0.0
        %1164 = vmatpush.xpose.msra.mxu0 0.0
        %1165 = vmatpush.xpose.msra.mxu0 0.0
        %1166 = vmatpush.xpose.msra.mxu0 0.0
        %1167 = vmatpush.xpose.msra.mxu0 %v1151
        %1168 = vmatpush.xpose.msra.mxu0 %v1149
        %1169 = vmatmul.f32.gmra.mxu0 %v1145
        %v1170 = vpop.f32.mrf.mxu0
        %v1171 = vadd.f32 %v1098, %v1170
        %1172 = vmatmul.f32.gmra.mxu0 %v1147
        %v1173 = vpop.f32.mrf.mxu0
        %v1174 = vadd.f32 %v1099, %v1173
        %1175 = vdwg.mxu0
        %vm1176 = vcmask 130048
        %v1177 = vsel %vm1176, %v1171, -inf
        %1178 = vmax.xlane.f32.xlu0 %v1177
        %v1179 = vpop.xlane.xlu0 %1178
        %v1180 = vsel %vm1176, %v1174, -inf
        %1181 = vmax.xlane.f32.xlu0 %v1180
        %v1182 = vpop.xlane.xlu0 %1181
        %v1183 = vsub.f32 %v1171, %v1179
        %v1184 = vsub.f32 %v1174, %v1182
        %v1185 = vmul.f32 %v1183, 1.442695
        %v1186 = vpow.pop %v1185
        %v1187 = vmul.f32 %v1184, 1.442695
        %v1188 = vpow.pop %v1187
        %v1189 = vsel %vm1176, %v1186, 0.0
        %1190 = vadd.xlane.f32.xlu0 %v1189
        %v1191 = vpop.xlane.xlu0 %1190
        %v1192 = vsel %vm1176, %v1188, 0.0
        %1193 = vadd.xlane.f32.xlu0 %v1192
        %v1194 = vpop.xlane.xlu0 %1193
        %v1195 = vrcp.pop %v1191
        %v1196 = vrcp.pop %v1194
        %v1197 = vmul.f32 %v1186, %v1195
        %v1198 = vmul.f32 %v1188, %v1196
        %1199 = vrot.lane.b32.xlu0 %v1133, 64
        %v1200 = vpop.permute.xlu0 %1199
        %1201 = vrot.lane.b32.xlu0 %v1136, 64
        %v1202 = vpop.permute.xlu0 %1201
        %v1206 = vsel %vm1176, %v1197, 0
        %v1209 = vsel %vm1176, %v1198, 0
        %1211 = vmatpush.msra.mxu0 0.0
        %1212 = vmatpush.msra.mxu0 0.0
        %1213 = vmatpush.msra.mxu0 0.0
        %1214 = vmatpush.msra.mxu0 0.0
        %1215 = vmatpush.msra.mxu0 0.0
        %1216 = vmatpush.msra.mxu0 0.0
        %1217 = vmatpush.msra.mxu0 0.0
        %1218 = vmatpush.msra.mxu0 0.0
        %1219 = vmatpush.msra.mxu0 0.0
        %1220 = vmatpush.msra.mxu0 0.0
        %1221 = vmatpush.msra.mxu0 0.0
        %1222 = vmatpush.msra.mxu0 0.0
        %1223 = vmatpush.msra.mxu0 0.0
        %1224 = vmatpush.msra.mxu0 0.0
        %1225 = vmatpush.msra.mxu0 %v1202
        %1226 = vmatpush.msra.mxu0 %v1200
        %1227 = vmatmul.f32.gmra.mxu0 %v1206
        %v1228 = vpop.f32.mrf.mxu0
        %v1229 = vadd.f32 0.0, %v1228
        %1230 = vmatmul.f32.gmra.mxu0 %v1209
        %v1231 = vpop.f32.mrf.mxu0
        %v1232 = vadd.f32 0.0, %v1231
        %1233 = vdwg.mxu0
        %1234 = vst.msk [vmem:[#allocation4] sm:$0xff] %vm1144, %v1229
        %1235 = vst.msk [vmem:[#allocation4 + $0x8] sm:$0xff] %vm1144, %v1232
        %1236 = vrot.lane.b32.xlu0 %v1133, 120
        %v1237 = vpop.permute.xlu0 %1236
        %1238 = vrot.lane.b32.xlu0 %v1136, 120
        %v1239 = vpop.permute.xlu0 %1238
        %1240 = vrot.lane.b32.xlu0 %v1133, 88
        %v1241 = vpop.permute.xlu0 %1240
        %1242 = vrot.lane.b32.xlu0 %v1136, 88
        %v1243 = vpop.permute.xlu0 %1242
        %v1244 = vsel %vm1144, %v1237, 0
        %v1246 = vsel %vm1144, %v1239, 0
        %v1248 = vsel %vm1144, %v1241, 0
        %v1250 = vsel %vm1144, %v1243, 0
        %1252 = vmatpush.xpose.msra.mxu0 0.0
        %1253 = vmatpush.xpose.msra.mxu0 0.0
        %1254 = vmatpush.xpose.msra.mxu0 0.0
        %1255 = vmatpush.xpose.msra.mxu0 0.0
        %1256 = vmatpush.xpose.msra.mxu0 0.0
        %1257 = vmatpush.xpose.msra.mxu0 0.0
        %1258 = vmatpush.xpose.msra.mxu0 0.0
        %1259 = vmatpush.xpose.msra.mxu0 0.0
        %1260 = vmatpush.xpose.msra.mxu0 0.0
        %1261 = vmatpush.xpose.msra.mxu0 0.0
        %1262 = vmatpush.xpose.msra.mxu0 0.0
        %1263 = vmatpush.xpose.msra.mxu0 0.0
        %1264 = vmatpush.xpose.msra.mxu0 0.0
        %1265 = vmatpush.xpose.msra.mxu0 0.0
        %1266 = vmatpush.xpose.msra.mxu0 %v1250
        %1267 = vmatpush.xpose.msra.mxu0 %v1248
        %1268 = vmatmul.f32.gmra.mxu0 %v1244
        %v1269 = vpop.f32.mrf.mxu0
        %v1270 = vadd.f32 %v1098, %v1269
        %1271 = vmatmul.f32.gmra.mxu0 %v1246
        %v1272 = vpop.f32.mrf.mxu0
        %v1273 = vadd.f32 %v1099, %v1272
        %1274 = vdwg.mxu0
        %v1275 = vsel %vm1176, %v1270, -inf
        %1276 = vmax.xlane.f32.xlu0 %v1275
        %v1277 = vpop.xlane.xlu0 %1276
        %v1278 = vsel %vm1176, %v1273, -inf
        %1279 = vmax.xlane.f32.xlu0 %v1278
        %v1280 = vpop.xlane.xlu0 %1279
        %v1281 = vsub.f32 %v1270, %v1277
        %v1282 = vsub.f32 %v1273, %v1280
        %v1283 = vmul.f32 %v1281, 1.442695
        %v1284 = vpow.pop %v1283
        %v1285 = vmul.f32 %v1282, 1.442695
        %v1286 = vpow.pop %v1285
        %v1287 = vsel %vm1176, %v1284, 0.0
        %1288 = vadd.xlane.f32.xlu0 %v1287
        %v1289 = vpop.xlane.xlu0 %1288
        %v1290 = vsel %vm1176, %v1286, 0.0
        %1291 = vadd.xlane.f32.xlu0 %v1290
        %v1292 = vpop.xlane.xlu0 %1291
        %v1293 = vrcp.pop %v1289
        %v1294 = vrcp.pop %v1292
        %v1295 = vmul.f32 %v1284, %v1293
        %v1296 = vmul.f32 %v1286, %v1294
        %1297 = vrot.lane.b32.xlu0 %v1133, 56
        %v1298 = vpop.permute.xlu0 %1297
        %1299 = vrot.lane.b32.xlu0 %v1136, 56
        %v1300 = vpop.permute.xlu0 %1299
        %v1304 = vsel %vm1176, %v1295, 0
        %v1307 = vsel %vm1176, %v1296, 0
        %1309 = vmatpush.msra.mxu0 0.0
        %1310 = vmatpush.msra.mxu0 0.0
        %1311 = vmatpush.msra.mxu0 0.0
        %1312 = vmatpush.msra.mxu0 0.0
        %1313 = vmatpush.msra.mxu0 0.0
        %1314 = vmatpush.msra.mxu0 0.0
        %1315 = vmatpush.msra.mxu0 0.0
        %1316 = vmatpush.msra.mxu0 0.0
        %1317 = vmatpush.msra.mxu0 0.0
        %1318 = vmatpush.msra.mxu0 0.0
        %1319 = vmatpush.msra.mxu0 0.0
        %1320 = vmatpush.msra.mxu0 0.0
        %1321 = vmatpush.msra.mxu0 0.0
        %1322 = vmatpush.msra.mxu0 0.0
        %1323 = vmatpush.msra.mxu0 %v1300
        %1324 = vmatpush.msra.mxu0 %v1298
        %1325 = vmatmul.f32.gmra.mxu0 %v1304
        %v1326 = vpop.f32.mrf.mxu0
        %v1327 = vadd.f32 0.0, %v1326
        %1328 = vmatmul.f32.gmra.mxu0 %v1307
        %v1329 = vpop.f32.mrf.mxu0
        %v1330 = vadd.f32 0.0, %v1329
        %1331 = vdwg.mxu0
        %1334 = vrot.lane.b32.xlu0 %v1327, 8
        %v1335 = vpop.permute.xlu0 %1334
        %1336 = vrot.lane.b32.xlu0 %v1330, 8
        %v1337 = vpop.permute.xlu0 %1336
        %vm1340 = vcmask 130112
        %1341 = vst.msk [vmem:[#allocation4] sm:$0xff] %vm1340, %v1335
        %1342 = vst.msk [vmem:[#allocation4 + $0x8] sm:$0xff] %vm1340, %v1337
        %1343 = vrot.lane.b32.xlu0 %v1133, 112
        %v1344 = vpop.permute.xlu0 %1343
        %1345 = vrot.lane.b32.xlu0 %v1136, 112
        %v1346 = vpop.permute.xlu0 %1345
        %1347 = vrot.lane.b32.xlu0 %v1133, 80
        %v1348 = vpop.permute.xlu0 %1347
        %1349 = vrot.lane.b32.xlu0 %v1136, 80
        %v1350 = vpop.permute.xlu0 %1349
        %v1351 = vsel %vm1144, %v1344, 0
        %v1353 = vsel %vm1144, %v1346, 0
        %v1355 = vsel %vm1144, %v1348, 0
        %v1357 = vsel %vm1144, %v1350, 0
        %1359 = vmatpush.xpose.msra.mxu0 0.0
        %1360 = vmatpush.xpose.msra.mxu0 0.0
        %1361 = vmatpush.xpose.msra.mxu0 0.0
        %1362 = vmatpush.xpose.msra.mxu0 0.0
        %1363 = vmatpush.xpose.msra.mxu0 0.0
        %1364 = vmatpush.xpose.msra.mxu0 0.0
        %1365 = vmatpush.xpose.msra.mxu0 0.0
        %1366 = vmatpush.xpose.msra.mxu0 0.0
        %1367 = vmatpush.xpose.msra.mxu0 0.0
        %1368 = vmatpush.xpose.msra.mxu0 0.0
        %1369 = vmatpush.xpose.msra.mxu0 0.0
        %1370 = vmatpush.xpose.msra.mxu0 0.0
        %1371 = vmatpush.xpose.msra.mxu0 0.0
        %1372 = vmatpush.xpose.msra.mxu0 0.0
        %1373 = vmatpush.xpose.msra.mxu0 %v1357
        %1374 = vmatpush.xpose.msra.mxu0 %v1355
        %1375 = vmatmul.f32.gmra.mxu0 %v1351
        %v1376 = vpop.f32.mrf.mxu0
        %v1377 = vadd.f32 %v1098, %v1376
        %1378 = vmatmul.f32.gmra.mxu0 %v1353
        %v1379 = vpop.f32.mrf.mxu0
        %v1380 = vadd.f32 %v1099, %v1379
        %1381 = vdwg.mxu0
        %v1382 = vsel %vm1176, %v1377, -inf
        %1383 = vmax.xlane.f32.xlu0 %v1382
        %v1384 = vpop.xlane.xlu0 %1383
        %v1385 = vsel %vm1176, %v1380, -inf
        %1386 = vmax.xlane.f32.xlu0 %v1385
        %v1387 = vpop.xlane.xlu0 %1386
        %v1388 = vsub.f32 %v1377, %v1384
        %v1389 = vsub.f32 %v1380, %v1387
        %v1390 = vmul.f32 %v1388, 1.442695
        %v1391 = vpow.pop %v1390
        %v1392 = vmul.f32 %v1389, 1.442695
        %v1393 = vpow.pop %v1392
        %v1394 = vsel %vm1176, %v1391, 0.0
        %1395 = vadd.xlane.f32.xlu0 %v1394
        %v1396 = vpop.xlane.xlu0 %1395
        %v1397 = vsel %vm1176, %v1393, 0.0
        %1398 = vadd.xlane.f32.xlu0 %v1397
        %v1399 = vpop.xlane.xlu0 %1398
        %v1400 = vrcp.pop %v1396
        %v1401 = vrcp.pop %v1399
        %v1402 = vmul.f32 %v1391, %v1400
        %v1403 = vmul.f32 %v1393, %v1401
        %1404 = vrot.lane.b32.xlu0 %v1133, 48
        %v1405 = vpop.permute.xlu0 %1404
        %1406 = vrot.lane.b32.xlu0 %v1136, 48
        %v1407 = vpop.permute.xlu0 %1406
        %v1411 = vsel %vm1176, %v1402, 0
        %v1414 = vsel %vm1176, %v1403, 0
        %1416 = vmatpush.msra.mxu0 0.0
        %1417 = vmatpush.msra.mxu0 0.0
        %1418 = vmatpush.msra.mxu0 0.0
        %1419 = vmatpush.msra.mxu0 0.0
        %1420 = vmatpush.msra.mxu0 0.0
        %1421 = vmatpush.msra.mxu0 0.0
        %1422 = vmatpush.msra.mxu0 0.0
        %1423 = vmatpush.msra.mxu0 0.0
        %1424 = vmatpush.msra.mxu0 0.0
        %1425 = vmatpush.msra.mxu0 0.0
        %1426 = vmatpush.msra.mxu0 0.0
        %1427 = vmatpush.msra.mxu0 0.0
        %1428 = vmatpush.msra.mxu0 0.0
        %1429 = vmatpush.msra.mxu0 0.0
        %1430 = vmatpush.msra.mxu0 %v1407
        %1431 = vmatpush.msra.mxu0 %v1405
        %1432 = vmatmul.f32.gmra.mxu0 %v1411
        %v1433 = vpop.f32.mrf.mxu0
        %v1434 = vadd.f32 0.0, %v1433
        %1435 = vmatmul.f32.gmra.mxu0 %v1414
        %v1436 = vpop.f32.mrf.mxu0
        %v1437 = vadd.f32 0.0, %v1436
        %1438 = vdwg.mxu0
        %1441 = vrot.lane.b32.xlu0 %v1434, 16
        %v1442 = vpop.permute.xlu0 %1441
        %1443 = vrot.lane.b32.xlu0 %v1437, 16
        %v1444 = vpop.permute.xlu0 %1443
        %vm1447 = vcmask 195712
        %1448 = vst.msk [vmem:[#allocation4] sm:$0xff] %vm1447, %v1442
        %1449 = vst.msk [vmem:[#allocation4 + $0x8] sm:$0xff] %vm1447, %v1444
        %1450 = vrot.lane.b32.xlu0 %v1133, 104
        %v1451 = vpop.permute.xlu0 %1450
        %1452 = vrot.lane.b32.xlu0 %v1136, 104
        %v1453 = vpop.permute.xlu0 %1452
        %1454 = vrot.lane.b32.xlu0 %v1133, 72
        %v1455 = vpop.permute.xlu0 %1454
        %1456 = vrot.lane.b32.xlu0 %v1136, 72
        %v1457 = vpop.permute.xlu0 %1456
        %v1458 = vsel %vm1144, %v1451, 0
        %v1460 = vsel %vm1144, %v1453, 0
        %v1462 = vsel %vm1144, %v1455, 0
        %v1464 = vsel %vm1144, %v1457, 0
        %1466 = vmatpush.xpose.msra.mxu0 0.0
        %1467 = vmatpush.xpose.msra.mxu0 0.0
        %1468 = vmatpush.xpose.msra.mxu0 0.0
        %1469 = vmatpush.xpose.msra.mxu0 0.0
        %1470 = vmatpush.xpose.msra.mxu0 0.0
        %1471 = vmatpush.xpose.msra.mxu0 0.0
        %1472 = vmatpush.xpose.msra.mxu0 0.0
        %1473 = vmatpush.xpose.msra.mxu0 0.0
        %1474 = vmatpush.xpose.msra.mxu0 0.0
        %1475 = vmatpush.xpose.msra.mxu0 0.0
        %1476 = vmatpush.xpose.msra.mxu0 0.0
        %1477 = vmatpush.xpose.msra.mxu0 0.0
        %1478 = vmatpush.xpose.msra.mxu0 0.0
        %1479 = vmatpush.xpose.msra.mxu0 0.0
        %1480 = vmatpush.xpose.msra.mxu0 %v1464
        %1481 = vmatpush.xpose.msra.mxu0 %v1462
        %1482 = vmatmul.f32.gmra.mxu0 %v1458
        %v1483 = vpop.f32.mrf.mxu0
        %v1484 = vadd.f32 %v1098, %v1483
        %1485 = vmatmul.f32.gmra.mxu0 %v1460
        %v1486 = vpop.f32.mrf.mxu0
        %v1487 = vadd.f32 %v1099, %v1486
        %1488 = vdwg.mxu0
        %v1489 = vsel %vm1176, %v1484, -inf
        %1490 = vmax.xlane.f32.xlu0 %v1489
        %v1491 = vpop.xlane.xlu0 %1490
        %v1492 = vsel %vm1176, %v1487, -inf
        %1493 = vmax.xlane.f32.xlu0 %v1492
        %v1494 = vpop.xlane.xlu0 %1493
        %v1495 = vsub.f32 %v1484, %v1491
        %v1496 = vsub.f32 %v1487, %v1494
        %v1497 = vmul.f32 %v1495, 1.442695
        %v1498 = vpow.pop %v1497
        %v1499 = vmul.f32 %v1496, 1.442695
        %v1500 = vpow.pop %v1499
        %v1501 = vsel %vm1176, %v1498, 0.0
        %1502 = vadd.xlane.f32.xlu0 %v1501
        %v1503 = vpop.xlane.xlu0 %1502
        %v1504 = vsel %vm1176, %v1500, 0.0
        %1505 = vadd.xlane.f32.xlu0 %v1504
        %v1506 = vpop.xlane.xlu0 %1505
        %v1507 = vrcp.pop %v1503
        %v1508 = vrcp.pop %v1506
        %v1509 = vmul.f32 %v1498, %v1507
        %v1510 = vmul.f32 %v1500, %v1508
        %1511 = vrot.lane.b32.xlu0 %v1133, 40
        %v1512 = vpop.permute.xlu0 %1511
        %1513 = vrot.lane.b32.xlu0 %v1136, 40
        %v1514 = vpop.permute.xlu0 %1513
        %v1518 = vsel %vm1176, %v1509, 0
        %v1521 = vsel %vm1176, %v1510, 0
        %1523 = vmatpush.msra.mxu0 0.0
        %1524 = vmatpush.msra.mxu0 0.0
        %1525 = vmatpush.msra.mxu0 0.0
        %1526 = vmatpush.msra.mxu0 0.0
        %1527 = vmatpush.msra.mxu0 0.0
        %1528 = vmatpush.msra.mxu0 0.0
        %1529 = vmatpush.msra.mxu0 0.0
        %1530 = vmatpush.msra.mxu0 0.0
        %1531 = vmatpush.msra.mxu0 0.0
        %1532 = vmatpush.msra.mxu0 0.0
        %1533 = vmatpush.msra.mxu0 0.0
        %1534 = vmatpush.msra.mxu0 0.0
        %1535 = vmatpush.msra.mxu0 0.0
        %1536 = vmatpush.msra.mxu0 0.0
        %1537 = vmatpush.msra.mxu0 %v1514
        %1538 = vmatpush.msra.mxu0 %v1512
        %1539 = vmatmul.f32.gmra.mxu0 %v1518
        %v1540 = vpop.f32.mrf.mxu0
        %v1541 = vadd.f32 0.0, %v1540
        %1542 = vmatmul.f32.gmra.mxu0 %v1521
        %v1543 = vpop.f32.mrf.mxu0
        %v1544 = vadd.f32 0.0, %v1543
        %1545 = vdwg.mxu0
        %1548 = vrot.lane.b32.xlu0 %v1541, 24
        %v1549 = vpop.permute.xlu0 %1548
        %1550 = vrot.lane.b32.xlu0 %v1544, 24
        %v1551 = vpop.permute.xlu0 %1550
        %vm1554 = vcmask 261312
        %1555 = vst.msk [vmem:[#allocation4] sm:$0xff] %vm1554, %v1549
        %1556 = vst.msk [vmem:[#allocation4 + $0x8] sm:$0xff] %vm1554, %v1551
        %v1557 = vld [vmem:[#allocation4] sm:$0xff]
        %v1558 = vld [vmem:[#allocation4 + $0x8] sm:$0xff]
        %v1559 = vld [vmem:[%s996] sm:$0xff]
        %v1560 = vld [vmem:[%s996 + $0x8] sm:$0xff]
        %v1561 = vld [vmem:[%s996 + $0x10] sm:$0xff]
        %v1562 = vld [vmem:[%s996 + $0x18] sm:$0xff]
        %v1563 = vld [vmem:[%s828] sm:$0x1]
        %v1565 = vperm.slane %v1563, 0
        %v1568 = vsel %vm1108, %v1557, 0
        %v1571 = vsel %vm1108, %v1558, 0
        %1573 = vmatpush.msra.mxu0 0.0
        %1574 = vmatpush.msra.mxu0 0.0
        %1575 = vmatpush.msra.mxu0 0.0
        %1576 = vmatpush.msra.mxu0 0.0
        %1577 = vmatpush.msra.mxu0 0.0
        %1578 = vmatpush.msra.mxu0 0.0
        %1579 = vmatpush.msra.mxu0 0.0
        %1580 = vmatpush.msra.mxu0 0.0
        %1581 = vmatpush.msra.mxu0 0.0
        %1582 = vmatpush.msra.mxu0 0.0
        %1583 = vmatpush.msra.mxu0 0.0
        %1584 = vmatpush.msra.mxu0 0.0
        %1585 = vmatpush.msra.mxu0 %v1562
        %1586 = vmatpush.msra.mxu0 %v1561
        %1587 = vmatpush.msra.mxu0 %v1560
        %1588 = vmatpush.msra.mxu0 %v1559
        %1589 = vmatmul.f32.gmra.mxu0 %v1568
        %v1590 = vpop.f32.mrf.mxu0
        %v1591 = vadd.f32 %v1565, %v1590
        %1592 = vmatmul.f32.gmra.mxu0 %v1571
        %v1593 = vpop.f32.mrf.mxu0
        %v1594 = vadd.f32 %v1565, %v1593
        %1595 = vdwg.mxu0
        %v1596 = vadd.f32 %v1591, %v1096
        %v1597 = vadd.f32 %v1594, %v1097
        %v1598 = vld [vmem:[%s837] sm:$0x1]
        %v1599 = vld [vmem:[%s846] sm:$0x1]
        %v1600 = vsel %vm1108, %v1596, 0.0
        %1601 = vadd.xlane.f32.xlu0 %v1600
        %v1602 = vpop.xlane.xlu0 %1601
        %v1603 = vsel %vm1108, %v1597, 0.0
        %1604 = vadd.xlane.f32.xlu0 %v1603
        %v1605 = vpop.xlane.xlu0 %1604
        %v1606 = vrcp.pop 32.0
        %v1607 = vmul.f32 32.0, %v1606
        %v1608 = vsub.f32 1.0, %v1607
        %v1609 = vmul.f32 %v1606, %v1608
        %v1610 = vadd.f32 %v1606, %v1609
        %vm1611 = vweird.f32 %v1606
        %v1612 = vsel %vm1611, %v1606, %v1610
        %v1613 = vmul.f32 %v1602, %v1612
        %v1614 = vmul.f32 %v1605, %v1612
        %v1615 = vsub.f32 %v1596, %v1613
        %v1616 = vsub.f32 %v1597, %v1614
        %v1617 = vmul.f32 %v1615, %v1615
        %v1618 = vmul.f32 %v1616, %v1616
        %v1619 = vsel %vm1108, %v1617, 0.0
        %1620 = vadd.xlane.f32.xlu0 %v1619
        %v1621 = vpop.xlane.xlu0 %1620
        %v1622 = vsel %vm1108, %v1618, 0.0
        %1623 = vadd.xlane.f32.xlu0 %v1622
        %v1624 = vpop.xlane.xlu0 %1623
        %v1625 = vmul.f32 %v1621, %v1612
        %v1626 = vmul.f32 %v1624, %v1612
        %v1627 = vadd.f32 %v1625, 1e-12
        %v1628 = vadd.f32 %v1626, 1e-12
        %v1629 = vrsqrt.pop %v1627
        %v1630 = vmul.f32 %v1629, %v1627
        %v1631 = vmul.f32 %v1630, %v1629
        %v1632 = vmul.f32 0.5, %v1631
        %v1633 = vsub.f32 1.5, %v1632
        %v1634 = vmul.f32 %v1629, %v1633
        %vm1635 = vweird.f32 %v1627
        %vm1636 = vweird.f32 %v1629
        %vm1637 = vmor %vm1635, %vm1636
        %v1638 = vsel %vm1637, %v1629, %v1634
        %v1639 = vrsqrt.pop %v1628
        %v1640 = vmul.f32 %v1639, %v1628
        %v1641 = vmul.f32 %v1640, %v1639
        %v1642 = vmul.f32 0.5, %v1641
        %v1643 = vsub.f32 1.5, %v1642
        %v1644 = vmul.f32 %v1639, %v1643
        %vm1645 = vweird.f32 %v1628
        %vm1646 = vweird.f32 %v1639
        %vm1647 = vmor %vm1645, %vm1646
        %v1648 = vsel %vm1647, %v1639, %v1644
        %v1649 = vmul.f32 %v1615, %v1638
        %v1650 = vmul.f32 %v1616, %v1648
        %v1652 = vperm.slane %v1598, 0
        %v1654 = vmul.f32 %v1649, %v1652
        %v1655 = vmul.f32 %v1650, %v1652
        %v1657 = vperm.slane %v1599, 0
        %v1659 = vadd.f32 %v1654, %v1657
        %v1660 = vadd.f32 %v1655, %v1657
        %v1661 = vld [vmem:[%s1001] sm:$0xff]
        %v1662 = vld [vmem:[%s1001 + $0x8] sm:$0xff]
        %v1663 = vld [vmem:[%s1001 + $0x10] sm:$0xff]
        %v1664 = vld [vmem:[%s1001 + $0x18] sm:$0xff]
        %v1665 = vld [vmem:[%s855] sm:$0x1]
        %v1667 = vperm.slane %v1665, 0
        %v1670 = vsel %vm1108, %v1659, 0
        %v1673 = vsel %vm1108, %v1660, 0
        %1675 = vmatpush.msra.mxu0 0.0
        %1676 = vmatpush.msra.mxu0 0.0
        %1677 = vmatpush.msra.mxu0 0.0
        %1678 = vmatpush.msra.mxu0 0.0
        %1679 = vmatpush.msra.mxu0 0.0
        %1680 = vmatpush.msra.mxu0 0.0
        %1681 = vmatpush.msra.mxu0 0.0
        %1682 = vmatpush.msra.mxu0 0.0
        %1683 = vmatpush.msra.mxu0 0.0
        %1684 = vmatpush.msra.mxu0 0.0
        %1685 = vmatpush.msra.mxu0 0.0
        %1686 = vmatpush.msra.mxu0 0.0
        %1687 = vmatpush.msra.mxu0 %v1664
        %1688 = vmatpush.msra.mxu0 %v1663
        %1689 = vmatpush.msra.mxu0 %v1662
        %1690 = vmatpush.msra.mxu0 %v1661
        %1691 = vmatmul.f32.gmra.mxu0 %v1670
        %v1692 = vpop.f32.mrf.mxu0
        %v1693 = vadd.f32 %v1667, %v1692
        %1694 = vmatmul.f32.gmra.mxu0 %v1673
        %v1695 = vpop.f32.mrf.mxu0
        %v1696 = vadd.f32 %v1667, %v1695
        %1697 = vdwg.mxu0
        %v1698 = vmul.f32 %v1693, 0.5
        %v1699 = vmul.f32 %v1696, 0.5
        %v1700 = vmul.f32 %v1693, 0.044715
        %v1701 = vmul.f32 %v1696, 0.044715
        %v1702 = vmul.f32 %v1700, %v1693
        %v1703 = vmul.f32 %v1701, %v1696
        %v1704 = vmul.f32 %v1702, %v1693
        %v1705 = vmul.f32 %v1703, %v1696
        %v1706 = vadd.f32 %v1693, %v1704
        %v1707 = vadd.f32 %v1696, %v1705
        %v1708 = vmul.f32 %v1706, 0.7978846
        %v1709 = vmul.f32 %v1707, 0.7978846
        %v1710 = vtanh.pop %v1708
        %v1711 = vtanh.pop %v1709
        %v1712 = vadd.f32 %v1710, 1.0
        %v1713 = vadd.f32 %v1711, 1.0
        %v1714 = vmul.f32 %v1698, %v1712
        %v1715 = vmul.f32 %v1699, %v1713
        %v1716 = vld [vmem:[%s1006] sm:$0xff]
        %v1717 = vld [vmem:[%s1006 + $0x8] sm:$0xff]
        %v1718 = vld [vmem:[%s1006 + $0x10] sm:$0xff]
        %v1719 = vld [vmem:[%s1006 + $0x18] sm:$0xff]
        %v1720 = vld [vmem:[%s1006 + $0x20] sm:$0xff]
        %v1721 = vld [vmem:[%s1006 + $0x28] sm:$0xff]
        %v1722 = vld [vmem:[%s1006 + $0x30] sm:$0xff]
        %v1723 = vld [vmem:[%s1006 + $0x38] sm:$0xff]
        %v1724 = vld [vmem:[%s864] sm:$0x1]
        %v1726 = vperm.slane %v1724, 0
        %vm1728 = vcmask 523264
        %v1730 = vsel %vm1728, %v1714, 0
        %v1733 = vsel %vm1728, %v1715, 0
        %1735 = vmatpush.msra.mxu0 0.0
        %1736 = vmatpush.msra.mxu0 0.0
        %1737 = vmatpush.msra.mxu0 0.0
        %1738 = vmatpush.msra.mxu0 0.0
        %1739 = vmatpush.msra.mxu0 0.0
        %1740 = vmatpush.msra.mxu0 0.0
        %1741 = vmatpush.msra.mxu0 0.0
        %1742 = vmatpush.msra.mxu0 0.0
        %1743 = vmatpush.msra.mxu0 %v1723
        %1744 = vmatpush.msra.mxu0 %v1722
        %1745 = vmatpush.msra.mxu0 %v1721
        %1746 = vmatpush.msra.mxu0 %v1720
        %1747 = vmatpush.msra.mxu0 %v1719
        %1748 = vmatpush.msra.mxu0 %v1718
        %1749 = vmatpush.msra.mxu0 %v1717
        %1750 = vmatpush.msra.mxu0 %v1716
        %1751 = vmatmul.f32.gmra.mxu0 %v1730
        %v1752 = vpop.f32.mrf.mxu0
        %v1753 = vadd.f32 %v1726, %v1752
        %1754 = vmatmul.f32.gmra.mxu0 %v1733
        %v1755 = vpop.f32.mrf.mxu0
        %v1756 = vadd.f32 %v1726, %v1755
        %1757 = vdwg.mxu0
        %v1758 = vadd.f32 %v1753, %v1659
        %v1759 = vadd.f32 %v1756, %v1660
        %v1760 = vld [vmem:[%s873] sm:$0x1]
        %v1761 = vld [vmem:[%s882] sm:$0x1]
        %v1762 = vsel %vm1108, %v1758, 0.0
        %1763 = vadd.xlane.f32.xlu0 %v1762
        %v1764 = vpop.xlane.xlu0 %1763
        %v1765 = vsel %vm1108, %v1759, 0.0
        %1766 = vadd.xlane.f32.xlu0 %v1765
        %v1767 = vpop.xlane.xlu0 %1766
        %v1768 = vmul.f32 %v1764, %v1612
        %v1769 = vmul.f32 %v1767, %v1612
        %v1770 = vsub.f32 %v1758, %v1768
        %v1771 = vsub.f32 %v1759, %v1769
        %v1772 = vmul.f32 %v1770, %v1770
        %v1773 = vmul.f32 %v1771, %v1771
        %v1774 = vsel %vm1108, %v1772, 0.0
        %1775 = vadd.xlane.f32.xlu0 %v1774
        %v1776 = vpop.xlane.xlu0 %1775
        %v1777 = vsel %vm1108, %v1773, 0.0
        %1778 = vadd.xlane.f32.xlu0 %v1777
        %v1779 = vpop.xlane.xlu0 %1778
        %v1780 = vmul.f32 %v1776, %v1612
        %v1781 = vmul.f32 %v1779, %v1612
        %v1782 = vadd.f32 %v1780, 1e-12
        %v1783 = vadd.f32 %v1781, 1e-12
        %v1784 = vrsqrt.pop %v1782
        %v1785 = vmul.f32 %v1784, %v1782
        %v1786 = vmul.f32 %v1785, %v1784
        %v1787 = vmul.f32 0.5, %v1786
        %v1788 = vsub.f32 1.5, %v1787
        %v1789 = vmul.f32 %v1784, %v1788
        %vm1790 = vweird.f32 %v1782
        %vm1791 = vweird.f32 %v1784
        %vm1792 = vmor %vm1790, %vm1791
        %v1793 = vsel %vm1792, %v1784, %v1789
        %v1794 = vrsqrt.pop %v1783
        %v1795 = vmul.f32 %v1794, %v1783
        %v1796 = vmul.f32 %v1795, %v1794
        %v1797 = vmul.f32 0.5, %v1796
        %v1798 = vsub.f32 1.5, %v1797
        %v1799 = vmul.f32 %v1794, %v1798
        %vm1800 = vweird.f32 %v1783
        %vm1801 = vweird.f32 %v1794
        %vm1802 = vmor %vm1800, %vm1801
        %v1803 = vsel %vm1802, %v1794, %v1799
        %v1804 = vmul.f32 %v1770, %v1793
        %v1805 = vmul.f32 %v1771, %v1803
        %v1807 = vperm.slane %v1760, 0
        %v1809 = vmul.f32 %v1804, %v1807
        %v1810 = vmul.f32 %v1805, %v1807
        %v1812 = vperm.slane %v1761, 0
        %v1814 = vadd.f32 %v1809, %v1812
        %v1815 = vadd.f32 %v1810, %v1812
        %1816 = vst.msk [vmem:[#allocation2] sm:$0xff] %vm1108, %v1814
        %1817 = vst.msk [vmem:[#allocation2 + $0x8] sm:$0xff] %vm1108, %v1815
        %p1818 = scmp.eq.s32.totalorder %s35, 1
        // Predicated region
        $region157: #{tpu_custom_call.1} parent=99 // pred_check
          %p1819 = pneg %p1818
        $region158: #{tpu_custom_call.1} parent=99 // pred_check_branch
          %1821 = sbr.rel (%p1819) target = $region160
        $region159: #{tpu_custom_call.1} parent=99 // pred_region
          %v1822 = vld [vmem:[%s3] sm:$0x3]
          %v1824 = vsel %vm1176, %v1822, 0
          %1826 = vmatpush.msra.mxu0 0.0
          %1827 = vmatpush.msra.mxu0 0.0
          %1828 = vmatpush.msra.mxu0 0.0
          %1829 = vmatpush.msra.mxu0 0.0
          %1830 = vmatpush.msra.mxu0 0.0
          %1831 = vmatpush.msra.mxu0 0.0
          %1832 = vmatpush.msra.mxu0 0.0
          %1833 = vmatpush.msra.mxu0 0.0
          %1834 = vmatpush.msra.mxu0 0.0
          %1835 = vmatpush.msra.mxu0 0.0
          %1836 = vmatpush.msra.mxu0 0.0
          %1837 = vmatpush.msra.mxu0 0.0
          %1838 = vmatpush.msra.mxu0 0.0
          %1839 = vmatpush.msra.mxu0 0.0
          %1840 = vmatpush.msra.mxu0 %v1815
          %1841 = vmatpush.msra.mxu0 %v1814
          %1842 = vmatmul.f32.gmra.mxu0 %v1824
          %v1843 = vpop.f32.mrf.mxu0
          %v1844 = vadd.f32 0.0, %v1843
          %1845 = vdwg.mxu0
          %v1846 = vld [vmem:[%s18] sm:$0xff]
          %v1847 = vld [vmem:[%s18 + $0x8] sm:$0xff]
          %v1848 = vld [vmem:[%s18 + $0x10] sm:$0xff]
          %v1849 = vld [vmem:[%s18 + $0x18] sm:$0xff]
          %v1850 = vld [vmem:[#allocation21] sm:$0x1]
          %v1852 = vperm.slane %v1850, 0
          %v1855 = vsel %vm1108, %v1844, 0
          %1857 = vmatpush.msra.mxu0 0.0
          %1858 = vmatpush.msra.mxu0 0.0
          %1859 = vmatpush.msra.mxu0 0.0
          %1860 = vmatpush.msra.mxu0 0.0
          %1861 = vmatpush.msra.mxu0 0.0
          %1862 = vmatpush.msra.mxu0 0.0
          %1863 = vmatpush.msra.mxu0 0.0
          %1864 = vmatpush.msra.mxu0 0.0
          %1865 = vmatpush.msra.mxu0 0.0
          %1866 = vmatpush.msra.mxu0 0.0
          %1867 = vmatpush.msra.mxu0 0.0
          %1868 = vmatpush.msra.mxu0 0.0
          %1869 = vmatpush.msra.mxu0 %v1849
          %1870 = vmatpush.msra.mxu0 %v1848
          %1871 = vmatpush.msra.mxu0 %v1847
          %1872 = vmatpush.msra.mxu0 %v1846
          %1873 = vmatmul.f32.gmra.mxu0 %v1855
          %v1874 = vpop.f32.mrf.mxu0
          %v1875 = vadd.f32 %v1852, %v1874
          %1876 = vdwg.mxu0
          %v1877 = vtanh.pop %v1875
          %vm1878 = vcmask 254976
          %1879 = vst.msk [vmem:[#allocation22] sm:$0x3] %vm1878, %v1877
        $region160: #{tpu_custom_call.1} parent=99 // pred_fallthru
          _
        // Predicated region
        $region161: #{tpu_custom_call.1} parent=99 // pred_check
          %p1880 = pneg %p528
        $region162: #{tpu_custom_call.1} parent=99 // pred_check_branch
          %1882 = sbr.rel (%p1880) target = $region164
        $region163: #{tpu_custom_call.1} parent=99 // pred_region
          %1884 = vsyncadd [#allocation7], 0
          %s1886 = sshll.u32 [#allocation22], 4
          %s1887 = int_to_ptr.vmem [resolvable:$true] %s1886
          %s1888 = sshll.u32 %s20, 4
          %s1889 = int_to_ptr.hbm [resolvable:$true] %s1888
          %1891 = dma.vmem_to_hbm [thread:$0]  %s1887, 32, %s1889, [#allocation7]
        $region164: #{tpu_custom_call.1} parent=99 // pred_fallthru
          _
        // Predicated region
        $region165: #{tpu_custom_call.1} parent=99 // pred_check
          %p1892 = pneg %p528
        $region166: #{tpu_custom_call.1} parent=99 // pred_check_branch
          %1894 = sbr.rel (%p1892) target = $region168
        $region167: #{tpu_custom_call.1} parent=99 // pred_region
          %1896 = dma.done [#allocation7], 32
        $region168: #{tpu_custom_call.1} parent=99 // pred_fallthru
          _
      $region100: #{tpu_custom_call.1} parent=5 // pred_fallthru
        _
      %p1897 = scmp.le.s32.totalorder 2, %s30
      // Predicated region
      $region169: #{tpu_custom_call.1} parent=5 // pred_check
        %p1898 = pneg %p1897
      $region170: #{tpu_custom_call.1} parent=5 // pred_check_branch
        %1900 = sbr.rel (%p1898) target = $region172
      $region171: #{tpu_custom_call.1} parent=5 // pred_region
        %s1901 = ssub.s32 %s30, 2
      $region172: #{tpu_custom_call.1} parent=5 // pred_fallthru
        _
    $region6: #{tpu_custom_call.1} parent=1 // loop_footer
      %s34 = sadd.s32 1, %s30
    $region7: #{tpu_custom_call.1} parent=1 // loop_footer_branch
      %29 = sbr.rel target = $region3
    $region8: #{tpu_custom_call.1} parent=1 // loop_exit
      _
    %1902 = vsyncpa [#allocation6], 1
    %s1903 = scalar_lea.sflag [#allocation6], 1
    %1904 = vsyncpa %s1903, 1
    %1905 = vsyncpa [#allocation9], 1
    %1906 = vsyncpa [#allocation12], 1
    %1907 = vsyncpa [#allocation7], 1
    %s1908 = scalar_lea.sflag [#allocation7], 1
    %1909 = vsyncpa %s1908, 1

</llo_original>
